<compile_context>
chip_gen: v7x
topology: tpu7x:2x2x1
jax: 0.10.0
libtpu: 0.0.40
codegen_flags: <defaults>
</compile_context>

<pallas_src>
import functools
from types import SimpleNamespace

import numpy as np
import jax
import jax.numpy as jnp
from jax import lax
from jax.experimental import pallas as pl
from jax.experimental.pallas import tpu as pltpu


def _round_up(x, m):
    return (x + m - 1) // m * m


def _cdiv(a, b):
    return -(-a // b)


# ----------------------------------------------------------------------------
# Fused kernel: per (batch-tile, time-chunk) grid step
#   1) gates_x for the whole chunk via one large MXU matmul into VMEM scratch
#   2) in-kernel fori_loop over the chunk's timesteps, h/c carried in vregs;
#      only h @ W_hh^T remains on the serial dependence chain.
# ----------------------------------------------------------------------------
def _encoder_lstm_kernel(x_ref, wih_ref, whh_ref, bias_ref, h_out_ref,
                         h_scr, c_scr, gx_scr,
                         *, seq_len, t_chunk, ragged, unroll, mxu_dtype):
    chunk = pl.program_id(1)            # time-chunk axis (innermost, sequential)
    n_chunks = pl.num_programs(1)

    @pl.when(chunk == 0)
    def _():                            # h0 = c0 = 0 (inputs.new_zeros)
        h_scr[...] = jnp.zeros_like(h_scr)
        c_scr[...] = jnp.zeros_like(c_scr)

    TB, Hp = h_scr.shape
    D = x_ref.shape[2]

    # ---- fused input projection for the whole chunk (one big MXU matmul) ----
    # (t_chunk, TB, D) -> (t_chunk*TB, D): leading-dim merge, layout-preserving
    # since TB is a multiple of 8.
    x2d = x_ref[...].reshape(t_chunk * TB, D)
    gx_scr[...] = (
        jnp.dot(x2d, wih_ref[...], preferred_element_type=jnp.float32)
        + bias_ref[...]
    )

    # NOTE: W_hh^T is read from VMEM inside the step (streamed into the MXU)
    # rather than materialized as a value, to avoid vreg spills in the loop.
    def step(t, carry):
        h, c = carry
        row = pl.multiple_of(t * TB, TB)
        gates = gx_scr[pl.ds(row, TB), :] + jnp.dot(
            h.astype(mxu_dtype), whh_ref[...],
            preferred_element_type=jnp.float32,
        )                                               # (TB, 4Hp), f32
        i_g = jax.nn.sigmoid(gates[:, 0 * Hp:1 * Hp])
        f_g = jax.nn.sigmoid(gates[:, 1 * Hp:2 * Hp])
        g_g = jnp.tanh(gates[:, 2 * Hp:3 * Hp])
        o_g = jax.nn.sigmoid(gates[:, 3 * Hp:4 * Hp])
        c_new = f_g * c + i_g * g_g
        h_new = o_g * jnp.tanh(c_new)
        return h_new, c_new

    carry0 = (h_scr[...], c_scr[...])
    if not ragged:
        # Static trip count on every chunk -> unrollable serial loop.
        h_fin, c_fin = lax.fori_loop(0, t_chunk, step, carry0, unroll=unroll)
    else:
        # Ragged last chunk: process only the valid timesteps.
        steps_here = jnp.minimum(t_chunk, seq_len - chunk * t_chunk)
        h_fin, c_fin = lax.fori_loop(0, steps_here, step, carry0)

    h_scr[...] = h_fin
    c_scr[...] = c_fin

    # Encoder returns only ht[-1]; write once at the last chunk of this tile.
    @pl.when(chunk == n_chunks - 1)
    def _():
        h_out_ref[...] = h_fin.astype(h_out_ref.dtype)


# ----------------------------------------------------------------------------
# Wrapper
# ----------------------------------------------------------------------------
def encoder_forward_pallas(x, w_ih, w_hh, b_ih, b_hh, *,
                           mxu_dtype=jnp.bfloat16,
                           vmem_budget_bytes=40 * 1024 * 1024):
    """x: (S, B, D) f32 (batch_first=False). Returns ht[-1]: (B, H) f32."""
    S, B, D = x.shape
    H = w_hh.shape[1]
    assert w_ih.shape == (4 * H, D) and w_hh.shape == (4 * H, H)
    assert b_ih.shape == (4 * H,) and b_hh.shape == (4 * H,)

    Bp = _round_up(max(B, 8), 8)        # sublane-aligned batch
    Hp = _round_up(max(H, 128), 128)    # lane-aligned hidden (gate slices free)

    # Batch tiling: when Bp splits cleanly in two, expose a leading "parallel"
    # grid axis so v7x's two TensorCores each run an independent LSTM chain.
    TB = Bp // 2 if (Bp >= 16 and (Bp // 2) % 8 == 0) else Bp
    n_btiles = Bp // TB

    # ---- VMEM-budget-aware time-chunk selection (v7x: 64 MiB physical VMEM;
    # v5e default scoped limit is 16 MiB -> we also raise vmem_limit_bytes).
    isz = int(np.dtype(mxu_dtype).itemsize)
    fixed = 2 * (D * 4 * Hp) * isz          # W_ih^T block (double-buffered)
    fixed += 2 * (Hp * 4 * Hp) * isz        # W_hh^T block
    fixed += 2 * (4 * Hp) * 4               # folded bias block
    fixed += 2 * (TB * Hp) * 4              # output block
    fixed += 2 * (TB * Hp) * 4              # h / c carry scratch
    per_t = 2 * (TB * D) * isz              # x-chunk rows (double-buffered, bf16)
    per_t += (TB * 4 * Hp) * 4              # gates_x scratch rows (f32)
    t_max = max(1, (vmem_budget_bytes - fixed) // per_t)
    t_chunk = int(min(S, t_max))
    n_chunks = _cdiv(S, t_chunk)
    t_chunk = _cdiv(S, n_chunks)            # balance chunks; never collapses to 1
    S_pad = n_chunks * t_chunk
    ragged = (S % t_chunk) != 0
    unroll = (True if t_chunk <= 8 else 4) if not ragged else None

    # Per-gate zero-padding preserves the PyTorch [i, f, g, o] gate layout and
    # keeps padded hidden lanes exactly zero (since h0 = c0 = 0).
    w_ih_p = jnp.pad(w_ih.reshape(4, H, D), ((0, 0), (0, Hp - H), (0, 0)))
    w_ih_p = w_ih_p.reshape(4 * Hp, D)
    w_hh_p = jnp.pad(w_hh.reshape(4, H, H), ((0, 0), (0, Hp - H), (0, Hp - H)))
    w_hh_p = w_hh_p.reshape(4 * Hp, Hp)
    bias_p = jnp.pad((b_ih + b_hh).reshape(4, H), ((0, 0), (0, Hp - H)))
    bias_p = bias_p.reshape(1, 4 * Hp).astype(jnp.float32)

    # bf16 MXU operands, f32 accumulation; elementwise/EUP path stays f32.
    wih_t = jnp.transpose(w_ih_p).astype(mxu_dtype)   # (D, 4Hp)
    whh_t = jnp.transpose(w_hh_p).astype(mxu_dtype)   # (Hp, 4Hp)

    x_p = jnp.pad(x, ((0, S_pad - S), (0, Bp - B), (0, 0))).astype(mxu_dtype)

    cost = pl.CostEstimate(
        flops=int(2 * S * Bp * (D + Hp) * 4 * Hp),
        transcendentals=int(5 * S * Bp * Hp),
        bytes_accessed=int(x_p.size * isz + wih_t.size * isz + whh_t.size * isz
                           + bias_p.size * 4 + Bp * Hp * 4),
    )

    kernel = functools.partial(
        _encoder_lstm_kernel,
        seq_len=S, t_chunk=t_chunk, ragged=ragged, unroll=unroll,
        mxu_dtype=mxu_dtype,
    )

    h_last = pl.pallas_call(
        kernel,
        out_shape=jax.ShapeDtypeStruct((Bp, Hp), jnp.float32),
        grid_spec=pltpu.PrefetchScalarGridSpec(
            num_scalar_prefetch=0,
            grid=(n_btiles, n_chunks),                 # time axis innermost
            in_specs=[
                pl.BlockSpec((t_chunk, TB, D), lambda b, c: (c, b, 0)),  # x chunk
                pl.BlockSpec((D, 4 * Hp), lambda b, c: (0, 0)),          # W_ih^T
                pl.BlockSpec((Hp, 4 * Hp), lambda b, c: (0, 0)),         # W_hh^T
                pl.BlockSpec((1, 4 * Hp), lambda b, c: (0, 0)),          # bias
            ],
            out_specs=pl.BlockSpec((TB, Hp), lambda b, c: (b, 0)),
            scratch_shapes=[
                pltpu.VMEM((TB, Hp), jnp.float32),                 # h carry
                pltpu.VMEM((TB, Hp), jnp.float32),                 # c carry
                pltpu.VMEM((t_chunk * TB, 4 * Hp), jnp.float32),   # gates_x chunk
            ],
        ),
        compiler_params=pltpu.CompilerParams(
            dimension_semantics=("parallel", "arbitrary"),
            vmem_limit_bytes=min(56 * 1024 * 1024,
                                 vmem_budget_bytes + 16 * 1024 * 1024),
        ),
        cost_estimate=cost,
    )(x_p, wih_t, whh_t, bias_p)

    return h_last[:B, :H]


# ----------------------------------------------------------------------------
# Pure-JAX reference (PyTorch nn.LSTM math).  mxu_dtype mirrors the kernel's
# bf16-operand / f32-accumulate matmul policy for a tight check.
# ----------------------------------------------------------------------------
def encoder_forward_ref(x, w_ih, w_hh, b_ih, b_hh, mxu_dtype=jnp.float32):
    S, B, D = x.shape
    H = w_hh.shape[1]
    wih_t = jnp.transpose(w_ih).astype(mxu_dtype)
    whh_t = jnp.transpose(w_hh).astype(mxu_dtype)
    bias = (b_ih + b_hh)[None, :]
    gx = jnp.einsum(
        "sbd,dg->sbg", x.astype(mxu_dtype), wih_t,
        preferred_element_type=jnp.float32,
    ) + bias

    def step(carry, gx_t):
        h, c = carry
        gates = gx_t + jnp.dot(
            h.astype(mxu_dtype), whh_t, preferred_element_type=jnp.float32
        )
        i_g = jax.nn.sigmoid(gates[:, 0 * H:1 * H])
        f_g = jax.nn.sigmoid(gates[:, 1 * H:2 * H])
        g_g = jnp.tanh(gates[:, 2 * H:3 * H])
        o_g = jax.nn.sigmoid(gates[:, 3 * H:4 * H])
        c_new = f_g * c + i_g * g_g
        h_new = o_g * jnp.tanh(c_new)
        return (h_new, c_new), None

    h0 = jnp.zeros((B, H), jnp.float32)
    c0 = jnp.zeros((B, H), jnp.float32)
    (h_fin, _), _ = lax.scan(step, (h0, c0), gx)
    return h_fin


if __name__ == "__main__":
    config = SimpleNamespace(
        projection=False, d_embed=32, d_proj=32, d_hidden=32,
        n_layers=1, dp_ratio=0.2, birnn=False, n_cells=1,
    )

    S, B = 8, 4
    D = config.d_proj if config.projection else config.d_embed
    H = config.d_hidden

    key = jax.random.PRNGKey(0)
    k_x, k_wi, k_wh, k_bi, k_bh = jax.random.split(key, 5)

    bound = 1.0 / jnp.sqrt(jnp.float32(H))
    w_ih = jax.random.uniform(k_wi, (4 * H, D), jnp.float32, -bound, bound)
    w_hh = jax.random.uniform(k_wh, (4 * H, H), jnp.float32, -bound, bound)
    b_ih = jax.random.uniform(k_bi, (4 * H,), jnp.float32, -bound, bound)
    b_hh = jax.random.uniform(k_bh, (4 * H,), jnp.float32, -bound, bound)

    x = jax.random.normal(k_x, (S, B, D), jnp.float32)

    out = encoder_forward_pallas(x, w_ih, w_hh, b_ih, b_hh)
    out = jax.block_until_ready(out)
    assert out.shape == (B, H)

    # Tight check vs a reference using the same bf16-operand matmul policy.
    ref_bf16 = encoder_forward_ref(x, w_ih, w_hh, b_ih, b_hh,
                                   mxu_dtype=jnp.bfloat16)
    assert jnp.allclose(out, ref_bf16, atol=2e-3, rtol=2e-3), \
        "mismatch vs bf16-operand JAX reference"

    # Sanity check vs the full-f32 (PyTorch-faithful) reference.
    ref_f32 = encoder_forward_ref(x, w_ih, w_hh, b_ih, b_hh,
                                  mxu_dtype=jnp.float32)
    assert jnp.allclose(out, ref_f32, atol=5e-2, rtol=5e-2), \
        "mismatch vs f32 JAX reference"

    print("KERNEL_OK")
</pallas_src>

<mosaic_0001>
module attributes {stable_mosaic.version = 11 : i64} {
  func.func @_encoder_lstm_kernel(%arg0: i32, %arg1: i32, %arg2: memref<8x8x32xbf16, #tpu.memory_space<vmem>>, %arg3: memref<32x512xbf16, #tpu.memory_space<vmem>>, %arg4: memref<128x512xbf16, #tpu.memory_space<vmem>>, %arg5: memref<1x512xf32, #tpu.memory_space<vmem>>, %arg6: memref<8x128xf32, #tpu.memory_space<vmem>>, %arg7: memref<8x128xf32, #tpu.memory_space<vmem>>, %arg8: memref<8x128xf32, #tpu.memory_space<vmem>>, %arg9: memref<64x512xf32, #tpu.memory_space<vmem>>) attributes {dimension_semantics = [#tpu.dimension_semantics<parallel>, #tpu.dimension_semantics<arbitrary>], iteration_bounds = array<i64: 1, 1>, scalar_prefetch = 0 : i64, scratch_operands = 3 : i64, tpu.core_type = #tpu.core_type<tc>, window_params = [{transform_indices = @transform_0, window_bounds = array<i64: 8, 8, 32>}, {pipeline_mode = #tpu.pipeline_mode<synchronous>, transform_indices = @transform_1, window_bounds = array<i64: 32, 512>}, {pipeline_mode = #tpu.pipeline_mode<synchronous>, transform_indices = @transform_2, window_bounds = array<i64: 128, 512>}, {pipeline_mode = #tpu.pipeline_mode<synchronous>, transform_indices = @transform_3, window_bounds = array<i64: 1, 512>}, {transform_indices = @transform_4, window_bounds = array<i64: 8, 128>}]} {
    %c0_i32 = arith.constant 0 : i32
    %0 = arith.cmpi eq, %arg1, %c0_i32 : i32
    %1 = arith.extui %0 : i1 to i32
    %c0_i32_0 = arith.constant 0 : i32
    %2 = arith.cmpi ne, %1, %c0_i32_0 : i32
    scf.if %2 {
      %cst_84 = arith.constant 0.000000e+00 : f32
      %282 = vector.broadcast %cst_84 : f32 to vector<8x128xf32>
      %c0_85 = arith.constant 0 : index
      %c0_86 = arith.constant 0 : index
      %283 = vector.load %arg7[%c0_85, %c0_86] : memref<8x128xf32, #tpu.memory_space<vmem>>, vector<8x128xf32>
      tpu.vector_store %arg7[%c0_85, %c0_86], %282 {strides = array<i32>} : memref<8x128xf32, #tpu.memory_space<vmem>>, vector<8x128xf32>,
      %cst_87 = arith.constant 0.000000e+00 : f32
      %284 = vector.broadcast %cst_87 : f32 to vector<8x128xf32>
      %c0_88 = arith.constant 0 : index
      %c0_89 = arith.constant 0 : index
      %285 = vector.load %arg8[%c0_88, %c0_89] : memref<8x128xf32, #tpu.memory_space<vmem>>, vector<8x128xf32>
      tpu.vector_store %arg8[%c0_88, %c0_89], %284 {strides = array<i32>} : memref<8x128xf32, #tpu.memory_space<vmem>>, vector<8x128xf32>,
    } else {
    }
    %c0 = arith.constant 0 : index
    %c0_1 = arith.constant 0 : index
    %c0_2 = arith.constant 0 : index
    %3 = vector.load %arg2[%c0, %c0_1, %c0_2] : memref<8x8x32xbf16, #tpu.memory_space<vmem>>, vector<8x8x32xbf16>
    %4 = vector.shape_cast %3 : vector<8x8x32xbf16> to vector<64x32xbf16>
    %c0_3 = arith.constant 0 : index
    %c0_4 = arith.constant 0 : index
    %5 = vector.load %arg3[%c0_3, %c0_4] : memref<32x512xbf16, #tpu.memory_space<vmem>>, vector<32x512xbf16>
    %cst = arith.constant dense<0.000000e+00> : vector<64x512xf32>
    %6 = tpu.matmul %4, %5, %cst {dimension_numbers = #tpu.dot_dimension_numbers<[1], [0], [0], [1], [0, 0, 1, 1], [], []>} : vector<64x32xbf16>, vector<32x512xbf16>, vector<64x512xf32> -> vector<64x512xf32>
    %c0_5 = arith.constant 0 : index
    %c0_6 = arith.constant 0 : index
    %7 = vector.load %arg5[%c0_5, %c0_6] : memref<1x512xf32, #tpu.memory_space<vmem>>, vector<1x512xf32>
    %8 = vector.broadcast %7 : vector<1x512xf32> to vector<64x512xf32>
    %9 = arith.addf %6, %8 : vector<64x512xf32>
    %c0_7 = arith.constant 0 : index
    %c0_8 = arith.constant 0 : index
    %10 = vector.load %arg9[%c0_7, %c0_8] : memref<64x512xf32, #tpu.memory_space<vmem>>, vector<64x512xf32>
    tpu.vector_store %arg9[%c0_7, %c0_8], %9 {strides = array<i32>} : memref<64x512xf32, #tpu.memory_space<vmem>>, vector<64x512xf32>,
    %c0_9 = arith.constant 0 : index
    %c0_10 = arith.constant 0 : index
    %11 = vector.load %arg7[%c0_9, %c0_10] : memref<8x128xf32, #tpu.memory_space<vmem>>, vector<8x128xf32>
    %c0_11 = arith.constant 0 : index
    %c0_12 = arith.constant 0 : index
    %12 = vector.load %arg8[%c0_11, %c0_12] : memref<8x128xf32, #tpu.memory_space<vmem>>, vector<8x128xf32>
    %c0_i32_13 = arith.constant 0 : i32
    %c8_i32 = arith.constant 8 : i32
    %13 = arith.muli %c0_i32_13, %c8_i32 : i32
    %14 = tpu.assume_multiple %13, 8 : i32
    %15 = arith.index_cast %14 : i32 to index
    %c0_14 = arith.constant 0 : index
    %16 = vector.load %arg9[%15, %c0_14] : memref<64x512xf32, #tpu.memory_space<vmem>>, vector<8x512xf32>
    %17 = arith.truncf %11 : vector<8x128xf32> to vector<8x128xbf16>
    %c0_15 = arith.constant 0 : index
    %c0_16 = arith.constant 0 : index
    %18 = vector.load %arg4[%c0_15, %c0_16] : memref<128x512xbf16, #tpu.memory_space<vmem>>, vector<128x512xbf16>
    %cst_17 = arith.constant dense<0.000000e+00> : vector<8x512xf32>
    %19 = tpu.matmul %17, %18, %cst_17 {dimension_numbers = #tpu.dot_dimension_numbers<[1], [0], [0], [1], [0, 0, 1, 1], [], []>} : vector<8x128xbf16>, vector<128x512xbf16>, vector<8x512xf32> -> vector<8x512xf32>
    %20 = arith.addf %16, %19 : vector<8x512xf32>
    %21 = vector.extract_strided_slice %20 {offsets = [0, 0], sizes = [8, 128], strides = [1, 1]} : vector<8x512xf32> to vector<8x128xf32>
    %22 = arith.negf %21 : vector<8x128xf32>
    %23 = math.exp %22 : vector<8x128xf32>
    %cst_18 = arith.constant 1.000000e+00 : f32
    %24 = vector.broadcast %cst_18 : f32 to vector<8x128xf32>
    %25 = arith.addf %24, %23 : vector<8x128xf32>
    %26 = arith.divf %24, %25 : vector<8x128xf32>
    %27 = vector.extract_strided_slice %20 {offsets = [0, 128], sizes = [8, 128], strides = [1, 1]} : vector<8x512xf32> to vector<8x128xf32>
    %28 = arith.negf %27 : vector<8x128xf32>
    %29 = math.exp %28 : vector<8x128xf32>
    %cst_19 = arith.constant 1.000000e+00 : f32
    %30 = vector.broadcast %cst_19 : f32 to vector<8x128xf32>
    %31 = arith.addf %30, %29 : vector<8x128xf32>
    %32 = arith.divf %30, %31 : vector<8x128xf32>
    %33 = vector.extract_strided_slice %20 {offsets = [0, 256], sizes = [8, 128], strides = [1, 1]} : vector<8x512xf32> to vector<8x128xf32>
    %34 = math.tanh %33 : vector<8x128xf32>
    %35 = vector.extract_strided_slice %20 {offsets = [0, 384], sizes = [8, 128], strides = [1, 1]} : vector<8x512xf32> to vector<8x128xf32>
    %36 = arith.negf %35 : vector<8x128xf32>
    %37 = math.exp %36 : vector<8x128xf32>
    %cst_20 = arith.constant 1.000000e+00 : f32
    %38 = vector.broadcast %cst_20 : f32 to vector<8x128xf32>
    %39 = arith.addf %38, %37 : vector<8x128xf32>
    %40 = arith.divf %38, %39 : vector<8x128xf32>
    %41 = arith.mulf %32, %12 : vector<8x128xf32>
    %42 = arith.mulf %26, %34 : vector<8x128xf32>
    %43 = arith.addf %41, %42 : vector<8x128xf32>
    %44 = math.tanh %43 : vector<8x128xf32>
    %45 = arith.mulf %40, %44 : vector<8x128xf32>
    %c1_i32 = arith.constant 1 : i32
    %c8_i32_21 = arith.constant 8 : i32
    %46 = arith.muli %c1_i32, %c8_i32_21 : i32
    %47 = tpu.assume_multiple %46, 8 : i32
    %48 = arith.index_cast %47 : i32 to index
    %c0_22 = arith.constant 0 : index
    %49 = vector.load %arg9[%48, %c0_22] : memref<64x512xf32, #tpu.memory_space<vmem>>, vector<8x512xf32>
    %50 = arith.truncf %45 : vector<8x128xf32> to vector<8x128xbf16>
    %c0_23 = arith.constant 0 : index
    %c0_24 = arith.constant 0 : index
    %51 = vector.load %arg4[%c0_23, %c0_24] : memref<128x512xbf16, #tpu.memory_space<vmem>>, vector<128x512xbf16>
    %cst_25 = arith.constant dense<0.000000e+00> : vector<8x512xf32>
    %52 = tpu.matmul %50, %51, %cst_25 {dimension_numbers = #tpu.dot_dimension_numbers<[1], [0], [0], [1], [0, 0, 1, 1], [], []>} : vector<8x128xbf16>, vector<128x512xbf16>, vector<8x512xf32> -> vector<8x512xf32>
    %53 = arith.addf %49, %52 : vector<8x512xf32>
    %54 = vector.extract_strided_slice %53 {offsets = [0, 0], sizes = [8, 128], strides = [1, 1]} : vector<8x512xf32> to vector<8x128xf32>
    %55 = arith.negf %54 : vector<8x128xf32>
    %56 = math.exp %55 : vector<8x128xf32>
    %cst_26 = arith.constant 1.000000e+00 : f32
    %57 = vector.broadcast %cst_26 : f32 to vector<8x128xf32>
    %58 = arith.addf %57, %56 : vector<8x128xf32>
    %59 = arith.divf %57, %58 : vector<8x128xf32>
    %60 = vector.extract_strided_slice %53 {offsets = [0, 128], sizes = [8, 128], strides = [1, 1]} : vector<8x512xf32> to vector<8x128xf32>
    %61 = arith.negf %60 : vector<8x128xf32>
    %62 = math.exp %61 : vector<8x128xf32>
    %cst_27 = arith.constant 1.000000e+00 : f32
    %63 = vector.broadcast %cst_27 : f32 to vector<8x128xf32>
    %64 = arith.addf %63, %62 : vector<8x128xf32>
    %65 = arith.divf %63, %64 : vector<8x128xf32>
    %66 = vector.extract_strided_slice %53 {offsets = [0, 256], sizes = [8, 128], strides = [1, 1]} : vector<8x512xf32> to vector<8x128xf32>
    %67 = math.tanh %66 : vector<8x128xf32>
    %68 = vector.extract_strided_slice %53 {offsets = [0, 384], sizes = [8, 128], strides = [1, 1]} : vector<8x512xf32> to vector<8x128xf32>
    %69 = arith.negf %68 : vector<8x128xf32>
    %70 = math.exp %69 : vector<8x128xf32>
    %cst_28 = arith.constant 1.000000e+00 : f32
    %71 = vector.broadcast %cst_28 : f32 to vector<8x128xf32>
    %72 = arith.addf %71, %70 : vector<8x128xf32>
    %73 = arith.divf %71, %72 : vector<8x128xf32>
    %74 = arith.mulf %65, %43 : vector<8x128xf32>
    %75 = arith.mulf %59, %67 : vector<8x128xf32>
    %76 = arith.addf %74, %75 : vector<8x128xf32>
    %77 = math.tanh %76 : vector<8x128xf32>
    %78 = arith.mulf %73, %77 : vector<8x128xf32>
    %c2_i32 = arith.constant 2 : i32
    %c8_i32_29 = arith.constant 8 : i32
    %79 = arith.muli %c2_i32, %c8_i32_29 : i32
    %80 = tpu.assume_multiple %79, 8 : i32
    %81 = arith.index_cast %80 : i32 to index
    %c0_30 = arith.constant 0 : index
    %82 = vector.load %arg9[%81, %c0_30] : memref<64x512xf32, #tpu.memory_space<vmem>>, vector<8x512xf32>
    %83 = arith.truncf %78 : vector<8x128xf32> to vector<8x128xbf16>
    %c0_31 = arith.constant 0 : index
    %c0_32 = arith.constant 0 : index
    %84 = vector.load %arg4[%c0_31, %c0_32] : memref<128x512xbf16, #tpu.memory_space<vmem>>, vector<128x512xbf16>
    %cst_33 = arith.constant dense<0.000000e+00> : vector<8x512xf32>
    %85 = tpu.matmul %83, %84, %cst_33 {dimension_numbers = #tpu.dot_dimension_numbers<[1], [0], [0], [1], [0, 0, 1, 1], [], []>} : vector<8x128xbf16>, vector<128x512xbf16>, vector<8x512xf32> -> vector<8x512xf32>
    %86 = arith.addf %82, %85 : vector<8x512xf32>
    %87 = vector.extract_strided_slice %86 {offsets = [0, 0], sizes = [8, 128], strides = [1, 1]} : vector<8x512xf32> to vector<8x128xf32>
    %88 = arith.negf %87 : vector<8x128xf32>
    %89 = math.exp %88 : vector<8x128xf32>
    %cst_34 = arith.constant 1.000000e+00 : f32
    %90 = vector.broadcast %cst_34 : f32 to vector<8x128xf32>
    %91 = arith.addf %90, %89 : vector<8x128xf32>
    %92 = arith.divf %90, %91 : vector<8x128xf32>
    %93 = vector.extract_strided_slice %86 {offsets = [0, 128], sizes = [8, 128], strides = [1, 1]} : vector<8x512xf32> to vector<8x128xf32>
    %94 = arith.negf %93 : vector<8x128xf32>
    %95 = math.exp %94 : vector<8x128xf32>
    %cst_35 = arith.constant 1.000000e+00 : f32
    %96 = vector.broadcast %cst_35 : f32 to vector<8x128xf32>
    %97 = arith.addf %96, %95 : vector<8x128xf32>
    %98 = arith.divf %96, %97 : vector<8x128xf32>
    %99 = vector.extract_strided_slice %86 {offsets = [0, 256], sizes = [8, 128], strides = [1, 1]} : vector<8x512xf32> to vector<8x128xf32>
    %100 = math.tanh %99 : vector<8x128xf32>
    %101 = vector.extract_strided_slice %86 {offsets = [0, 384], sizes = [8, 128], strides = [1, 1]} : vector<8x512xf32> to vector<8x128xf32>
    %102 = arith.negf %101 : vector<8x128xf32>
    %103 = math.exp %102 : vector<8x128xf32>
    %cst_36 = arith.constant 1.000000e+00 : f32
    %104 = vector.broadcast %cst_36 : f32 to vector<8x128xf32>
    %105 = arith.addf %104, %103 : vector<8x128xf32>
    %106 = arith.divf %104, %105 : vector<8x128xf32>
    %107 = arith.mulf %98, %76 : vector<8x128xf32>
    %108 = arith.mulf %92, %100 : vector<8x128xf32>
    %109 = arith.addf %107, %108 : vector<8x128xf32>
    %110 = math.tanh %109 : vector<8x128xf32>
    %111 = arith.mulf %106, %110 : vector<8x128xf32>
    %c3_i32 = arith.constant 3 : i32
    %c8_i32_37 = arith.constant 8 : i32
    %112 = arith.muli %c3_i32, %c8_i32_37 : i32
    %113 = tpu.assume_multiple %112, 8 : i32
    %114 = arith.index_cast %113 : i32 to index
    %c0_38 = arith.constant 0 : index
    %115 = vector.load %arg9[%114, %c0_38] : memref<64x512xf32, #tpu.memory_space<vmem>>, vector<8x512xf32>
    %116 = arith.truncf %111 : vector<8x128xf32> to vector<8x128xbf16>
    %c0_39 = arith.constant 0 : index
    %c0_40 = arith.constant 0 : index
    %117 = vector.load %arg4[%c0_39, %c0_40] : memref<128x512xbf16, #tpu.memory_space<vmem>>, vector<128x512xbf16>
    %cst_41 = arith.constant dense<0.000000e+00> : vector<8x512xf32>
    %118 = tpu.matmul %116, %117, %cst_41 {dimension_numbers = #tpu.dot_dimension_numbers<[1], [0], [0], [1], [0, 0, 1, 1], [], []>} : vector<8x128xbf16>, vector<128x512xbf16>, vector<8x512xf32> -> vector<8x512xf32>
    %119 = arith.addf %115, %118 : vector<8x512xf32>
    %120 = vector.extract_strided_slice %119 {offsets = [0, 0], sizes = [8, 128], strides = [1, 1]} : vector<8x512xf32> to vector<8x128xf32>
    %121 = arith.negf %120 : vector<8x128xf32>
    %122 = math.exp %121 : vector<8x128xf32>
    %cst_42 = arith.constant 1.000000e+00 : f32
    %123 = vector.broadcast %cst_42 : f32 to vector<8x128xf32>
    %124 = arith.addf %123, %122 : vector<8x128xf32>
    %125 = arith.divf %123, %124 : vector<8x128xf32>
    %126 = vector.extract_strided_slice %119 {offsets = [0, 128], sizes = [8, 128], strides = [1, 1]} : vector<8x512xf32> to vector<8x128xf32>
    %127 = arith.negf %126 : vector<8x128xf32>
    %128 = math.exp %127 : vector<8x128xf32>
    %cst_43 = arith.constant 1.000000e+00 : f32
    %129 = vector.broadcast %cst_43 : f32 to vector<8x128xf32>
    %130 = arith.addf %129, %128 : vector<8x128xf32>
    %131 = arith.divf %129, %130 : vector<8x128xf32>
    %132 = vector.extract_strided_slice %119 {offsets = [0, 256], sizes = [8, 128], strides = [1, 1]} : vector<8x512xf32> to vector<8x128xf32>
    %133 = math.tanh %132 : vector<8x128xf32>
    %134 = vector.extract_strided_slice %119 {offsets = [0, 384], sizes = [8, 128], strides = [1, 1]} : vector<8x512xf32> to vector<8x128xf32>
    %135 = arith.negf %134 : vector<8x128xf32>
    %136 = math.exp %135 : vector<8x128xf32>
    %cst_44 = arith.constant 1.000000e+00 : f32
    %137 = vector.broadcast %cst_44 : f32 to vector<8x128xf32>
    %138 = arith.addf %137, %136 : vector<8x128xf32>
    %139 = arith.divf %137, %138 : vector<8x128xf32>
    %140 = arith.mulf %131, %109 : vector<8x128xf32>
    %141 = arith.mulf %125, %133 : vector<8x128xf32>
    %142 = arith.addf %140, %141 : vector<8x128xf32>
    %143 = math.tanh %142 : vector<8x128xf32>
    %144 = arith.mulf %139, %143 : vector<8x128xf32>
    %c4_i32 = arith.constant 4 : i32
    %c8_i32_45 = arith.constant 8 : i32
    %145 = arith.muli %c4_i32, %c8_i32_45 : i32
    %146 = tpu.assume_multiple %145, 8 : i32
    %147 = arith.index_cast %146 : i32 to index
    %c0_46 = arith.constant 0 : index
    %148 = vector.load %arg9[%147, %c0_46] : memref<64x512xf32, #tpu.memory_space<vmem>>, vector<8x512xf32>
    %149 = arith.truncf %144 : vector<8x128xf32> to vector<8x128xbf16>
    %c0_47 = arith.constant 0 : index
    %c0_48 = arith.constant 0 : index
    %150 = vector.load %arg4[%c0_47, %c0_48] : memref<128x512xbf16, #tpu.memory_space<vmem>>, vector<128x512xbf16>
    %cst_49 = arith.constant dense<0.000000e+00> : vector<8x512xf32>
    %151 = tpu.matmul %149, %150, %cst_49 {dimension_numbers = #tpu.dot_dimension_numbers<[1], [0], [0], [1], [0, 0, 1, 1], [], []>} : vector<8x128xbf16>, vector<128x512xbf16>, vector<8x512xf32> -> vector<8x512xf32>
    %152 = arith.addf %148, %151 : vector<8x512xf32>
    %153 = vector.extract_strided_slice %152 {offsets = [0, 0], sizes = [8, 128], strides = [1, 1]} : vector<8x512xf32> to vector<8x128xf32>
    %154 = arith.negf %153 : vector<8x128xf32>
    %155 = math.exp %154 : vector<8x128xf32>
    %cst_50 = arith.constant 1.000000e+00 : f32
    %156 = vector.broadcast %cst_50 : f32 to vector<8x128xf32>
    %157 = arith.addf %156, %155 : vector<8x128xf32>
    %158 = arith.divf %156, %157 : vector<8x128xf32>
    %159 = vector.extract_strided_slice %152 {offsets = [0, 128], sizes = [8, 128], strides = [1, 1]} : vector<8x512xf32> to vector<8x128xf32>
    %160 = arith.negf %159 : vector<8x128xf32>
    %161 = math.exp %160 : vector<8x128xf32>
    %cst_51 = arith.constant 1.000000e+00 : f32
    %162 = vector.broadcast %cst_51 : f32 to vector<8x128xf32>
    %163 = arith.addf %162, %161 : vector<8x128xf32>
    %164 = arith.divf %162, %163 : vector<8x128xf32>
    %165 = vector.extract_strided_slice %152 {offsets = [0, 256], sizes = [8, 128], strides = [1, 1]} : vector<8x512xf32> to vector<8x128xf32>
    %166 = math.tanh %165 : vector<8x128xf32>
    %167 = vector.extract_strided_slice %152 {offsets = [0, 384], sizes = [8, 128], strides = [1, 1]} : vector<8x512xf32> to vector<8x128xf32>
    %168 = arith.negf %167 : vector<8x128xf32>
    %169 = math.exp %168 : vector<8x128xf32>
    %cst_52 = arith.constant 1.000000e+00 : f32
    %170 = vector.broadcast %cst_52 : f32 to vector<8x128xf32>
    %171 = arith.addf %170, %169 : vector<8x128xf32>
    %172 = arith.divf %170, %171 : vector<8x128xf32>
    %173 = arith.mulf %164, %142 : vector<8x128xf32>
    %174 = arith.mulf %158, %166 : vector<8x128xf32>
    %175 = arith.addf %173, %174 : vector<8x128xf32>
    %176 = math.tanh %175 : vector<8x128xf32>
    %177 = arith.mulf %172, %176 : vector<8x128xf32>
    %c5_i32 = arith.constant 5 : i32
    %c8_i32_53 = arith.constant 8 : i32
    %178 = arith.muli %c5_i32, %c8_i32_53 : i32
    %179 = tpu.assume_multiple %178, 8 : i32
    %180 = arith.index_cast %179 : i32 to index
    %c0_54 = arith.constant 0 : index
    %181 = vector.load %arg9[%180, %c0_54] : memref<64x512xf32, #tpu.memory_space<vmem>>, vector<8x512xf32>
    %182 = arith.truncf %177 : vector<8x128xf32> to vector<8x128xbf16>
    %c0_55 = arith.constant 0 : index
    %c0_56 = arith.constant 0 : index
    %183 = vector.load %arg4[%c0_55, %c0_56] : memref<128x512xbf16, #tpu.memory_space<vmem>>, vector<128x512xbf16>
    %cst_57 = arith.constant dense<0.000000e+00> : vector<8x512xf32>
    %184 = tpu.matmul %182, %183, %cst_57 {dimension_numbers = #tpu.dot_dimension_numbers<[1], [0], [0], [1], [0, 0, 1, 1], [], []>} : vector<8x128xbf16>, vector<128x512xbf16>, vector<8x512xf32> -> vector<8x512xf32>
    %185 = arith.addf %181, %184 : vector<8x512xf32>
    %186 = vector.extract_strided_slice %185 {offsets = [0, 0], sizes = [8, 128], strides = [1, 1]} : vector<8x512xf32> to vector<8x128xf32>
    %187 = arith.negf %186 : vector<8x128xf32>
    %188 = math.exp %187 : vector<8x128xf32>
    %cst_58 = arith.constant 1.000000e+00 : f32
    %189 = vector.broadcast %cst_58 : f32 to vector<8x128xf32>
    %190 = arith.addf %189, %188 : vector<8x128xf32>
    %191 = arith.divf %189, %190 : vector<8x128xf32>
    %192 = vector.extract_strided_slice %185 {offsets = [0, 128], sizes = [8, 128], strides = [1, 1]} : vector<8x512xf32> to vector<8x128xf32>
    %193 = arith.negf %192 : vector<8x128xf32>
    %194 = math.exp %193 : vector<8x128xf32>
    %cst_59 = arith.constant 1.000000e+00 : f32
    %195 = vector.broadcast %cst_59 : f32 to vector<8x128xf32>
    %196 = arith.addf %195, %194 : vector<8x128xf32>
    %197 = arith.divf %195, %196 : vector<8x128xf32>
    %198 = vector.extract_strided_slice %185 {offsets = [0, 256], sizes = [8, 128], strides = [1, 1]} : vector<8x512xf32> to vector<8x128xf32>
    %199 = math.tanh %198 : vector<8x128xf32>
    %200 = vector.extract_strided_slice %185 {offsets = [0, 384], sizes = [8, 128], strides = [1, 1]} : vector<8x512xf32> to vector<8x128xf32>
    %201 = arith.negf %200 : vector<8x128xf32>
    %202 = math.exp %201 : vector<8x128xf32>
    %cst_60 = arith.constant 1.000000e+00 : f32
    %203 = vector.broadcast %cst_60 : f32 to vector<8x128xf32>
    %204 = arith.addf %203, %202 : vector<8x128xf32>
    %205 = arith.divf %203, %204 : vector<8x128xf32>
    %206 = arith.mulf %197, %175 : vector<8x128xf32>
    %207 = arith.mulf %191, %199 : vector<8x128xf32>
    %208 = arith.addf %206, %207 : vector<8x128xf32>
    %209 = math.tanh %208 : vector<8x128xf32>
    %210 = arith.mulf %205, %209 : vector<8x128xf32>
    %c6_i32 = arith.constant 6 : i32
    %c8_i32_61 = arith.constant 8 : i32
    %211 = arith.muli %c6_i32, %c8_i32_61 : i32
    %212 = tpu.assume_multiple %211, 8 : i32
    %213 = arith.index_cast %212 : i32 to index
    %c0_62 = arith.constant 0 : index
    %214 = vector.load %arg9[%213, %c0_62] : memref<64x512xf32, #tpu.memory_space<vmem>>, vector<8x512xf32>
    %215 = arith.truncf %210 : vector<8x128xf32> to vector<8x128xbf16>
    %c0_63 = arith.constant 0 : index
    %c0_64 = arith.constant 0 : index
    %216 = vector.load %arg4[%c0_63, %c0_64] : memref<128x512xbf16, #tpu.memory_space<vmem>>, vector<128x512xbf16>
    %cst_65 = arith.constant dense<0.000000e+00> : vector<8x512xf32>
    %217 = tpu.matmul %215, %216, %cst_65 {dimension_numbers = #tpu.dot_dimension_numbers<[1], [0], [0], [1], [0, 0, 1, 1], [], []>} : vector<8x128xbf16>, vector<128x512xbf16>, vector<8x512xf32> -> vector<8x512xf32>
    %218 = arith.addf %214, %217 : vector<8x512xf32>
    %219 = vector.extract_strided_slice %218 {offsets = [0, 0], sizes = [8, 128], strides = [1, 1]} : vector<8x512xf32> to vector<8x128xf32>
    %220 = arith.negf %219 : vector<8x128xf32>
    %221 = math.exp %220 : vector<8x128xf32>
    %cst_66 = arith.constant 1.000000e+00 : f32
    %222 = vector.broadcast %cst_66 : f32 to vector<8x128xf32>
    %223 = arith.addf %222, %221 : vector<8x128xf32>
    %224 = arith.divf %222, %223 : vector<8x128xf32>
    %225 = vector.extract_strided_slice %218 {offsets = [0, 128], sizes = [8, 128], strides = [1, 1]} : vector<8x512xf32> to vector<8x128xf32>
    %226 = arith.negf %225 : vector<8x128xf32>
    %227 = math.exp %226 : vector<8x128xf32>
    %cst_67 = arith.constant 1.000000e+00 : f32
    %228 = vector.broadcast %cst_67 : f32 to vector<8x128xf32>
    %229 = arith.addf %228, %227 : vector<8x128xf32>
    %230 = arith.divf %228, %229 : vector<8x128xf32>
    %231 = vector.extract_strided_slice %218 {offsets = [0, 256], sizes = [8, 128], strides = [1, 1]} : vector<8x512xf32> to vector<8x128xf32>
    %232 = math.tanh %231 : vector<8x128xf32>
    %233 = vector.extract_strided_slice %218 {offsets = [0, 384], sizes = [8, 128], strides = [1, 1]} : vector<8x512xf32> to vector<8x128xf32>
    %234 = arith.negf %233 : vector<8x128xf32>
    %235 = math.exp %234 : vector<8x128xf32>
    %cst_68 = arith.constant 1.000000e+00 : f32
    %236 = vector.broadcast %cst_68 : f32 to vector<8x128xf32>
    %237 = arith.addf %236, %235 : vector<8x128xf32>
    %238 = arith.divf %236, %237 : vector<8x128xf32>
    %239 = arith.mulf %230, %208 : vector<8x128xf32>
    %240 = arith.mulf %224, %232 : vector<8x128xf32>
    %241 = arith.addf %239, %240 : vector<8x128xf32>
    %242 = math.tanh %241 : vector<8x128xf32>
    %243 = arith.mulf %238, %242 : vector<8x128xf32>
    %c7_i32 = arith.constant 7 : i32
    %c8_i32_69 = arith.constant 8 : i32
    %244 = arith.muli %c7_i32, %c8_i32_69 : i32
    %245 = tpu.assume_multiple %244, 8 : i32
    %246 = arith.index_cast %245 : i32 to index
    %c0_70 = arith.constant 0 : index
    %247 = vector.load %arg9[%246, %c0_70] : memref<64x512xf32, #tpu.memory_space<vmem>>, vector<8x512xf32>
    %248 = arith.truncf %243 : vector<8x128xf32> to vector<8x128xbf16>
    %c0_71 = arith.constant 0 : index
    %c0_72 = arith.constant 0 : index
    %249 = vector.load %arg4[%c0_71, %c0_72] : memref<128x512xbf16, #tpu.memory_space<vmem>>, vector<128x512xbf16>
    %cst_73 = arith.constant dense<0.000000e+00> : vector<8x512xf32>
    %250 = tpu.matmul %248, %249, %cst_73 {dimension_numbers = #tpu.dot_dimension_numbers<[1], [0], [0], [1], [0, 0, 1, 1], [], []>} : vector<8x128xbf16>, vector<128x512xbf16>, vector<8x512xf32> -> vector<8x512xf32>
    %251 = arith.addf %247, %250 : vector<8x512xf32>
    %252 = vector.extract_strided_slice %251 {offsets = [0, 0], sizes = [8, 128], strides = [1, 1]} : vector<8x512xf32> to vector<8x128xf32>
    %253 = arith.negf %252 : vector<8x128xf32>
    %254 = math.exp %253 : vector<8x128xf32>
    %cst_74 = arith.constant 1.000000e+00 : f32
    %255 = vector.broadcast %cst_74 : f32 to vector<8x128xf32>
    %256 = arith.addf %255, %254 : vector<8x128xf32>
    %257 = arith.divf %255, %256 : vector<8x128xf32>
    %258 = vector.extract_strided_slice %251 {offsets = [0, 128], sizes = [8, 128], strides = [1, 1]} : vector<8x512xf32> to vector<8x128xf32>
    %259 = arith.negf %258 : vector<8x128xf32>
    %260 = math.exp %259 : vector<8x128xf32>
    %cst_75 = arith.constant 1.000000e+00 : f32
    %261 = vector.broadcast %cst_75 : f32 to vector<8x128xf32>
    %262 = arith.addf %261, %260 : vector<8x128xf32>
    %263 = arith.divf %261, %262 : vector<8x128xf32>
    %264 = vector.extract_strided_slice %251 {offsets = [0, 256], sizes = [8, 128], strides = [1, 1]} : vector<8x512xf32> to vector<8x128xf32>
    %265 = math.tanh %264 : vector<8x128xf32>
    %266 = vector.extract_strided_slice %251 {offsets = [0, 384], sizes = [8, 128], strides = [1, 1]} : vector<8x512xf32> to vector<8x128xf32>
    %267 = arith.negf %266 : vector<8x128xf32>
    %268 = math.exp %267 : vector<8x128xf32>
    %cst_76 = arith.constant 1.000000e+00 : f32
    %269 = vector.broadcast %cst_76 : f32 to vector<8x128xf32>
    %270 = arith.addf %269, %268 : vector<8x128xf32>
    %271 = arith.divf %269, %270 : vector<8x128xf32>
    %272 = arith.mulf %263, %241 : vector<8x128xf32>
    %273 = arith.mulf %257, %265 : vector<8x128xf32>
    %274 = arith.addf %272, %273 : vector<8x128xf32>
    %275 = math.tanh %274 : vector<8x128xf32>
    %276 = arith.mulf %271, %275 : vector<8x128xf32>
    %c8_i32_77 = arith.constant 8 : i32
    %c0_78 = arith.constant 0 : index
    %c0_79 = arith.constant 0 : index
    %277 = vector.load %arg7[%c0_78, %c0_79] : memref<8x128xf32, #tpu.memory_space<vmem>>, vector<8x128xf32>
    tpu.vector_store %arg7[%c0_78, %c0_79], %276 {strides = array<i32>} : memref<8x128xf32, #tpu.memory_space<vmem>>, vector<8x128xf32>,
    %c0_80 = arith.constant 0 : index
    %c0_81 = arith.constant 0 : index
    %278 = vector.load %arg8[%c0_80, %c0_81] : memref<8x128xf32, #tpu.memory_space<vmem>>, vector<8x128xf32>
    tpu.vector_store %arg8[%c0_80, %c0_81], %274 {strides = array<i32>} : memref<8x128xf32, #tpu.memory_space<vmem>>, vector<8x128xf32>,
    %c0_i32_82 = arith.constant 0 : i32
    %279 = arith.cmpi eq, %arg1, %c0_i32_82 : i32
    %280 = arith.extui %279 : i1 to i32
    %c0_i32_83 = arith.constant 0 : i32
    %281 = arith.cmpi ne, %280, %c0_i32_83 : i32
    scf.if %281 {
      %c0_84 = arith.constant 0 : index
      %c0_85 = arith.constant 0 : index
      %282 = vector.load %arg6[%c0_84, %c0_85] : memref<8x128xf32, #tpu.memory_space<vmem>>, vector<8x128xf32>
      tpu.vector_store %arg6[%c0_84, %c0_85], %276 {strides = array<i32>} : memref<8x128xf32, #tpu.memory_space<vmem>>, vector<8x128xf32>,
    } else {
    }
    return
  }
  func.func @transform_0(%arg0: i32, %arg1: i32) -> (i32, i32, i32) {
    %c0_i32 = arith.constant 0 : i32
    %c0_i32_0 = arith.constant 0 : i32
    return %arg1, %arg0, %c0_i32 : i32, i32, i32
  }
  func.func @transform_1(%arg0: i32, %arg1: i32) -> (i32, i32) {
    %c0_i32 = arith.constant 0 : i32
    %c0_i32_0 = arith.constant 0 : i32
    %c0_i32_1 = arith.constant 0 : i32
    return %c0_i32, %c0_i32_0 : i32, i32
  }
  func.func @transform_2(%arg0: i32, %arg1: i32) -> (i32, i32) {
    %c0_i32 = arith.constant 0 : i32
    %c0_i32_0 = arith.constant 0 : i32
    %c0_i32_1 = arith.constant 0 : i32
    return %c0_i32, %c0_i32_0 : i32, i32
  }
  func.func @transform_3(%arg0: i32, %arg1: i32) -> (i32, i32) {
    %c0_i32 = arith.constant 0 : i32
    %c0_i32_0 = arith.constant 0 : i32
    %c0_i32_1 = arith.constant 0 : i32
    return %c0_i32, %c0_i32_0 : i32, i32
  }
  func.func @transform_4(%arg0: i32, %arg1: i32) -> (i32, i32) {
    %c0_i32 = arith.constant 0 : i32
    %c0_i32_0 = arith.constant 0 : i32
    return %arg0, %c0_i32 : i32, i32
  }
}

</mosaic_0001>

<llo_original>
// kernel: tpu_custom_call.1
$region0: #{tpu_custom_call.1}
  #allocation0 [shape = 'u32[]', space=smem, size = 0x4, offset = 0x4, fixed_abs, tag = 'smem constant byte address 0x4 - core index']
  #allocation1 [shape = 'u32[144,128]{1,0:T(1,128)}', space=vmem, size = 0x12000, scoped, tag = 'internal scratch']
  #allocation2 [shape = 'f32[8,128]{1,0:T(8,128)}', space=vmem, size = 0x1000, scoped, tag = 'scratch operand']
  #allocation3 [shape = 'f32[8,128]{1,0:T(8,128)}', space=vmem, size = 0x1000, scoped, tag = 'scratch operand']
  #allocation4 [shape = 'f32[64,512]{1,0:T(8,128)}', space=vmem, size = 0x20000, scoped, tag = 'scratch operand']
  %s0 = inlined_call_operand.hbm [shape: bf16[8,8,32], index: 0, kind: input, shape index: {}]
  %s1 = inlined_call_operand.hbm [shape: bf16[32,512], index: 1, kind: input, shape index: {}]
  %s2 = inlined_call_operand.hbm [shape: bf16[128,512], index: 2, kind: input, shape index: {}]
  %s3 = inlined_call_operand.vmem [shape: f32[1,512], index: 3, kind: input, shape index: {}]
  %s4 = inlined_call_operand.hbm [shape: f32[8,128], index: 4, kind: output, shape index: {}]
  %s5 = sld [smem:[#allocation0]]
  $region46: #{tpu_custom_call.1} parent=0
    _
  %s7 = ssub.s32 1, %s5
  %s8 = scalar_select 0, %s7, %s5
  $region1: #{tpu_custom_call.1} parent=0
    #allocation5 [shape = 'u8[16384]{0}', space=vmem, size = 0x4000, scoped, tag = 'input window, operand 0, single buffered']
    #allocation6 [shape = 's32[1]{0}', space=sflag, size = 0x4, scoped, tag = 'scoped memory for tpu_custom_call.1']
    #allocation7 [shape = 's32[1]{0}', space=sflag, size = 0x4, scoped, tag = 'scoped memory for tpu_custom_call.1']
    #allocation8 [shape = 'u8[32768]{0}', space=vmem, size = 0x8000, scoped, tag = 'input window, operand 1, single buffered']
    #allocation9 [shape = 's32[1]{0}', space=sflag, size = 0x4, scoped, tag = 'scoped memory for tpu_custom_call.1']
    #allocation10 [shape = 'u8[131072]{0}', space=vmem, size = 0x20000, scoped, tag = 'input window, operand 2, single buffered']
    #allocation11 [shape = 'u8[4096]{0}', space=vmem, size = 0x1000, scoped, tag = 'output window, operand 0, single buffered']
    %9 = vsyncpa [#allocation6], 0
    %10 = vsyncpa [#allocation9], 0
    %11 = vsyncpa [#allocation7], 0
    // Predicated region
    $region2: #{tpu_custom_call.1} parent=1 // pred_check
      _
    $region3: #{tpu_custom_call.1} parent=1 // pred_check_branch
      %13 = sbr.rel (0) target = $region5
    $region4: #{tpu_custom_call.1} parent=1 // pred_region
      %s15 = ssub.s32 512, 512
      %16 = vsyncadd [#allocation6], %s15
      %s17 = sshll.u32 [#allocation5], 4
      %s18 = int_to_ptr.vmem [resolvable:$true] %s17
      %23 = dma.hbm_to_vmem [thread:$0]  %s0, 512, %s18, [#allocation6], 64, 64, 4
    $region5: #{tpu_custom_call.1} parent=1 // pred_fallthru
      _
    // Predicated region
    $region6: #{tpu_custom_call.1} parent=1 // pred_check
      _
    $region7: #{tpu_custom_call.1} parent=1 // pred_check_branch
      %25 = sbr.rel (0) target = $region9
    $region8: #{tpu_custom_call.1} parent=1 // pred_region
      %s27 = ssub.s32 1024, 1024
      %28 = vsyncadd [#allocation9], %s27
      %s29 = sshll.u32 [#allocation8], 4
      %s30 = int_to_ptr.vmem [resolvable:$true] %s29
      %35 = dma.hbm_to_vmem [thread:$0]  %s1, 1024, %s30, [#allocation9], 256, 256, 16
    $region9: #{tpu_custom_call.1} parent=1 // pred_fallthru
      _
    // Predicated region
    $region10: #{tpu_custom_call.1} parent=1 // pred_check
      _
    $region11: #{tpu_custom_call.1} parent=1 // pred_check_branch
      %37 = sbr.rel (0) target = $region13
    $region12: #{tpu_custom_call.1} parent=1 // pred_region
      %s39 = ssub.s32 4096, 4096
      %40 = vsyncadd [#allocation9], %s39
      %s41 = sshll.u32 [#allocation10], 4
      %s42 = int_to_ptr.vmem [resolvable:$true] %s41
      %47 = dma.hbm_to_vmem [thread:$0]  %s2, 4096, %s42, [#allocation9], 256, 256, 16
    $region13: #{tpu_custom_call.1} parent=1 // pred_fallthru
      _
    // Predicated region
    $region14: #{tpu_custom_call.1} parent=1 // pred_check
      _
    $region15: #{tpu_custom_call.1} parent=1 // pred_check_branch
      %49 = sbr.rel (0) target = $region17
    $region16: #{tpu_custom_call.1} parent=1 // pred_region
      _
    $region17: #{tpu_custom_call.1} parent=1 // pred_fallthru
      _
    // Predicated region
    $region18: #{tpu_custom_call.1} parent=1 // pred_check
      _
    $region19: #{tpu_custom_call.1} parent=1 // pred_check_branch
      %51 = sbr.rel (0) target = $region21
    $region20: #{tpu_custom_call.1} parent=1 // pred_region
      %52 = dma.done [#allocation6], 512
    $region21: #{tpu_custom_call.1} parent=1 // pred_fallthru
      _
    // Predicated region
    $region22: #{tpu_custom_call.1} parent=1 // pred_check
      _
    $region23: #{tpu_custom_call.1} parent=1 // pred_check_branch
      %54 = sbr.rel (0) target = $region25
    $region24: #{tpu_custom_call.1} parent=1 // pred_region
      %55 = dma.done [#allocation9], 1024
    $region25: #{tpu_custom_call.1} parent=1 // pred_fallthru
      _
    // Predicated region
    $region26: #{tpu_custom_call.1} parent=1 // pred_check
      _
    $region27: #{tpu_custom_call.1} parent=1 // pred_check_branch
      %57 = sbr.rel (0) target = $region29
    $region28: #{tpu_custom_call.1} parent=1 // pred_region
      %58 = dma.done [#allocation9], 4096
    $region29: #{tpu_custom_call.1} parent=1 // pred_fallthru
      _
    %p60 = scmp.eq.s32.totalorder 0, 0
    // Predicated region
    $region30: #{tpu_custom_call.1} parent=1 // pred_check
      %p61 = pneg %p60
    $region31: #{tpu_custom_call.1} parent=1 // pred_check_branch
      %63 = sbr.rel (%p61) target = $region33
    $region32: #{tpu_custom_call.1} parent=1 // pred_region
      %64 = vst [vmem:[#allocation2] sm:$0xff] 0.0
      %65 = vst [vmem:[#allocation3] sm:$0xff] 0.0
    $region33: #{tpu_custom_call.1} parent=1 // pred_fallthru
      _
    %v66 = vld [vmem:[#allocation5] sm:$0xf]
    %v67 = vld [vmem:[#allocation5 + $0x4] sm:$0xf]
    %v68 = vld [vmem:[#allocation5 + $0x8] sm:$0xf]
    %v69 = vld [vmem:[#allocation5 + $0xc] sm:$0xf]
    %v70 = vld [vmem:[#allocation5 + $0x10] sm:$0xf]
    %v71 = vld [vmem:[#allocation5 + $0x14] sm:$0xf]
    %v72 = vld [vmem:[#allocation5 + $0x18] sm:$0xf]
    %v73 = vld [vmem:[#allocation5 + $0x1c] sm:$0xf]
    %v74 = vld [vmem:[#allocation8] sm:$0xff]
    %v75 = vld [vmem:[#allocation8 + $0x8] sm:$0xff]
    %v76 = vld [vmem:[#allocation8 + $0x10] sm:$0xff]
    %v77 = vld [vmem:[#allocation8 + $0x18] sm:$0xff]
    %v78 = vld [vmem:[#allocation8 + $0x20] sm:$0xff]
    %v79 = vld [vmem:[#allocation8 + $0x28] sm:$0xff]
    %v80 = vld [vmem:[#allocation8 + $0x30] sm:$0xff]
    %v81 = vld [vmem:[#allocation8 + $0x38] sm:$0xff]
    %v82 = vld [vmem:[%s3] sm:$0xf]
    %v84 = vlaneseq
    %v85 = vshrl.u32 %v84, 7
    %v86 = vsub.s32 0, %v85
    %v87 = vrot.slane %v82, %v86
    %v88 = vlaneseq
    %v89 = vshrl.u32 %v88, 7
    %v90 = vsub.s32 1, %v89
    %v91 = vrot.slane %v82, %v90
    %v92 = vlaneseq
    %v93 = vshrl.u32 %v92, 7
    %v94 = vsub.s32 2, %v93
    %v95 = vrot.slane %v82, %v94
    %v96 = vlaneseq
    %v97 = vshrl.u32 %v96, 7
    %v98 = vsub.s32 3, %v97
    %v99 = vrot.slane %v82, %v98
    %v112 = vunpack.c.l.b16 %v66
    %v113 = vunpack.c.l.b16 %v67
    %v114 = vunpack.c.l.b16 %v68
    %v115 = vunpack.c.l.b16 %v69
    %v116 = vunpack.c.l.b16 %v70
    %v117 = vunpack.c.l.b16 %v71
    %v118 = vunpack.c.l.b16 %v72
    %v119 = vunpack.c.l.b16 %v73
    %v120 = vpack.c.b16 %v113, %v112
    %v121 = vpack.c.b16 %v115, %v114
    %v122 = vpack.c.b16 %v117, %v116
    %v123 = vpack.c.b16 %v119, %v118
    %v132 = vunpack.c.l.b16 %v74
    %v133 = vunpack.c.h.b16 %v74
    %v134 = vunpack.c.l.b16 %v75
    %v135 = vunpack.c.h.b16 %v75
    %v136 = vunpack.c.l.b16 %v76
    %v137 = vunpack.c.h.b16 %v76
    %v138 = vunpack.c.l.b16 %v77
    %v139 = vunpack.c.h.b16 %v77
    %v140 = vunpack.c.l.b16 %v78
    %v141 = vunpack.c.h.b16 %v78
    %v142 = vunpack.c.l.b16 %v79
    %v143 = vunpack.c.h.b16 %v79
    %v144 = vunpack.c.l.b16 %v80
    %v145 = vunpack.c.h.b16 %v80
    %v146 = vunpack.c.l.b16 %v81
    %v147 = vunpack.c.h.b16 %v81
    %v148 = vpack.c.b16 %v136, %v132
    %v149 = vpack.c.b16 %v137, %v133
    %v150 = vpack.c.b16 %v138, %v134
    %v151 = vpack.c.b16 %v139, %v135
    %v152 = vpack.c.b16 %v144, %v140
    %v153 = vpack.c.b16 %v145, %v141
    %v154 = vpack.c.b16 %v146, %v142
    %v155 = vpack.c.b16 %v147, %v143
    %vm164 = vcmask 261120
    %v166 = vsel %vm164, %v120, 0
    %v169 = vsel %vm164, %v121, 0
    %v172 = vsel %vm164, %v122, 0
    %v175 = vsel %vm164, %v123, 0
    %177 = vmatprep.subr.bf16.mxu0 %v149
    %178 = vmatpush1.bf16.msra.mxu0 %v148
    %179 = vmatprep.subr.bf16.mxu0 %v153
    %180 = vmatpush1.bf16.msra.mxu0 %v152
    %181 = vmatprep.subr.bf16.mxu0 0
    %182 = vmatpush1.bf16.msra.mxu0 0
    %183 = vmatprep.subr.bf16.mxu0 0
    %184 = vmatpush1.bf16.msra.mxu0 0
    %185 = vmatprep.subr.bf16.mxu0 0
    %186 = vmatpush1.bf16.msra.mxu0 0
    %187 = vmatprep.subr.bf16.mxu0 0
    %188 = vmatpush1.bf16.msra.mxu0 0
    %189 = vmatprep.subr.bf16.mxu0 0
    %190 = vmatpush1.bf16.msra.mxu0 0
    %191 = vmatprep.subr.bf16.mxu0 0
    %192 = vmatpush1.bf16.msra.mxu0 0
    %193 = vmatprep.subr.bf16.mxu0 0
    %194 = vmatpush1.bf16.msra.mxu0 0
    %195 = vmatprep.subr.bf16.mxu0 0
    %196 = vmatpush1.bf16.msra.mxu0 0
    %197 = vmatprep.subr.bf16.mxu0 0
    %198 = vmatpush1.bf16.msra.mxu0 0
    %199 = vmatprep.subr.bf16.mxu0 0
    %200 = vmatpush1.bf16.msra.mxu0 0
    %201 = vmatprep.subr.bf16.mxu0 0
    %202 = vmatpush1.bf16.msra.mxu0 0
    %203 = vmatprep.subr.bf16.mxu0 0
    %204 = vmatpush1.bf16.msra.mxu0 0
    %205 = vmatprep.subr.bf16.mxu0 0
    %206 = vmatpush1.bf16.msra.mxu0 0
    %207 = vmatprep.subr.bf16.mxu0 0
    %208 = vmatpush1.bf16.msra.mxu0 0
    %209 = vmatprep.mubr.bf16.mxu0 0
    %210 = vmatmul.mubr.bf16.gmra.mrb[0].mxu0 %v166
    %v211 = vpop.f32.mrb[0].mxu0
    %v212 = vadd.f32 %v87, %v211
    %v213 = vpop.f32.mrb[0].mxu0
    %v214 = vadd.f32 %v91, %v213
    %v215 = vpop.f32.mrb[0].mxu0
    %v216 = vadd.f32 %v87, %v215
    %v217 = vpop.f32.mrb[0].mxu0
    %v218 = vadd.f32 %v91, %v217
    %219 = vmatprep.mubr.bf16.mxu0 0
    %220 = vmatmul.mubr.bf16.gmra.mrb[0].mxu0 %v169
    %v221 = vpop.f32.mrb[0].mxu0
    %v222 = vadd.f32 %v87, %v221
    %v223 = vpop.f32.mrb[0].mxu0
    %v224 = vadd.f32 %v91, %v223
    %v225 = vpop.f32.mrb[0].mxu0
    %v226 = vadd.f32 %v87, %v225
    %v227 = vpop.f32.mrb[0].mxu0
    %v228 = vadd.f32 %v91, %v227
    %229 = vmatprep.mubr.bf16.mxu0 0
    %230 = vmatmul.mubr.bf16.gmra.mrb[0].mxu0 %v172
    %v231 = vpop.f32.mrb[0].mxu0
    %v232 = vadd.f32 %v87, %v231
    %v233 = vpop.f32.mrb[0].mxu0
    %v234 = vadd.f32 %v91, %v233
    %v235 = vpop.f32.mrb[0].mxu0
    %v236 = vadd.f32 %v87, %v235
    %v237 = vpop.f32.mrb[0].mxu0
    %v238 = vadd.f32 %v91, %v237
    %239 = vmatprep.mubr.bf16.mxu0 0
    %240 = vmatmul.mubr.bf16.gmra.mrb[0].mxu0 %v175
    %v241 = vpop.f32.mrb[0].mxu0
    %v242 = vadd.f32 %v87, %v241
    %v243 = vpop.f32.mrb[0].mxu0
    %v244 = vadd.f32 %v91, %v243
    %v245 = vpop.f32.mrb[0].mxu0
    %v246 = vadd.f32 %v87, %v245
    %v247 = vpop.f32.mrb[0].mxu0
    %v248 = vadd.f32 %v91, %v247
    %249 = vdwg.mxu0
    %250 = vmatprep.subr.bf16.mxu0 %v151
    %251 = vmatpush1.bf16.msra.mxu0 %v150
    %252 = vmatprep.subr.bf16.mxu0 %v155
    %253 = vmatpush1.bf16.msra.mxu0 %v154
    %254 = vmatprep.subr.bf16.mxu0 0
    %255 = vmatpush1.bf16.msra.mxu0 0
    %256 = vmatprep.subr.bf16.mxu0 0
    %257 = vmatpush1.bf16.msra.mxu0 0
    %258 = vmatprep.subr.bf16.mxu0 0
    %259 = vmatpush1.bf16.msra.mxu0 0
    %260 = vmatprep.subr.bf16.mxu0 0
    %261 = vmatpush1.bf16.msra.mxu0 0
    %262 = vmatprep.subr.bf16.mxu0 0
    %263 = vmatpush1.bf16.msra.mxu0 0
    %264 = vmatprep.subr.bf16.mxu0 0
    %265 = vmatpush1.bf16.msra.mxu0 0
    %266 = vmatprep.subr.bf16.mxu0 0
    %267 = vmatpush1.bf16.msra.mxu0 0
    %268 = vmatprep.subr.bf16.mxu0 0
    %269 = vmatpush1.bf16.msra.mxu0 0
    %270 = vmatprep.subr.bf16.mxu0 0
    %271 = vmatpush1.bf16.msra.mxu0 0
    %272 = vmatprep.subr.bf16.mxu0 0
    %273 = vmatpush1.bf16.msra.mxu0 0
    %274 = vmatprep.subr.bf16.mxu0 0
    %275 = vmatpush1.bf16.msra.mxu0 0
    %276 = vmatprep.subr.bf16.mxu0 0
    %277 = vmatpush1.bf16.msra.mxu0 0
    %278 = vmatprep.subr.bf16.mxu0 0
    %279 = vmatpush1.bf16.msra.mxu0 0
    %280 = vmatprep.subr.bf16.mxu0 0
    %281 = vmatpush1.bf16.msra.mxu0 0
    %282 = vmatprep.mubr.bf16.mxu0 0
    %283 = vmatmul.mubr.bf16.gmra.mrb[0].mxu0 %v166
    %v284 = vpop.f32.mrb[0].mxu0
    %v285 = vadd.f32 %v95, %v284
    %v286 = vpop.f32.mrb[0].mxu0
    %v287 = vadd.f32 %v99, %v286
    %v288 = vpop.f32.mrb[0].mxu0
    %v289 = vadd.f32 %v95, %v288
    %v290 = vpop.f32.mrb[0].mxu0
    %v291 = vadd.f32 %v99, %v290
    %292 = vmatprep.mubr.bf16.mxu0 0
    %293 = vmatmul.mubr.bf16.gmra.mrb[0].mxu0 %v169
    %v294 = vpop.f32.mrb[0].mxu0
    %v295 = vadd.f32 %v95, %v294
    %v296 = vpop.f32.mrb[0].mxu0
    %v297 = vadd.f32 %v99, %v296
    %v298 = vpop.f32.mrb[0].mxu0
    %v299 = vadd.f32 %v95, %v298
    %v300 = vpop.f32.mrb[0].mxu0
    %v301 = vadd.f32 %v99, %v300
    %302 = vmatprep.mubr.bf16.mxu0 0
    %303 = vmatmul.mubr.bf16.gmra.mrb[0].mxu0 %v172
    %v304 = vpop.f32.mrb[0].mxu0
    %v305 = vadd.f32 %v95, %v304
    %v306 = vpop.f32.mrb[0].mxu0
    %v307 = vadd.f32 %v99, %v306
    %v308 = vpop.f32.mrb[0].mxu0
    %v309 = vadd.f32 %v95, %v308
    %v310 = vpop.f32.mrb[0].mxu0
    %v311 = vadd.f32 %v99, %v310
    %312 = vmatprep.mubr.bf16.mxu0 0
    %313 = vmatmul.mubr.bf16.gmra.mrb[0].mxu0 %v175
    %v314 = vpop.f32.mrb[0].mxu0
    %v315 = vadd.f32 %v95, %v314
    %v316 = vpop.f32.mrb[0].mxu0
    %v317 = vadd.f32 %v99, %v316
    %v318 = vpop.f32.mrb[0].mxu0
    %v319 = vadd.f32 %v95, %v318
    %v320 = vpop.f32.mrb[0].mxu0
    %v321 = vadd.f32 %v99, %v320
    %322 = vdwg.mxu0
    %323 = vst [vmem:[#allocation4] sm:$0xff] %v212
    %324 = vst [vmem:[#allocation4 + $0x8] sm:$0xff] %v214
    %325 = vst [vmem:[#allocation4 + $0x10] sm:$0xff] %v285
    %326 = vst [vmem:[#allocation4 + $0x18] sm:$0xff] %v287
    %327 = vst [vmem:[#allocation4 + $0x20] sm:$0xff] %v216
    %328 = vst [vmem:[#allocation4 + $0x28] sm:$0xff] %v218
    %329 = vst [vmem:[#allocation4 + $0x30] sm:$0xff] %v289
    %330 = vst [vmem:[#allocation4 + $0x38] sm:$0xff] %v291
    %331 = vst [vmem:[#allocation4 + $0x40] sm:$0xff] %v222
    %332 = vst [vmem:[#allocation4 + $0x48] sm:$0xff] %v224
    %333 = vst [vmem:[#allocation4 + $0x50] sm:$0xff] %v295
    %334 = vst [vmem:[#allocation4 + $0x58] sm:$0xff] %v297
    %335 = vst [vmem:[#allocation4 + $0x60] sm:$0xff] %v226
    %336 = vst [vmem:[#allocation4 + $0x68] sm:$0xff] %v228
    %337 = vst [vmem:[#allocation4 + $0x70] sm:$0xff] %v299
    %338 = vst [vmem:[#allocation4 + $0x78] sm:$0xff] %v301
    %339 = vst [vmem:[#allocation4 + $0x80] sm:$0xff] %v232
    %340 = vst [vmem:[#allocation4 + $0x88] sm:$0xff] %v234
    %341 = vst [vmem:[#allocation4 + $0x90] sm:$0xff] %v305
    %342 = vst [vmem:[#allocation4 + $0x98] sm:$0xff] %v307
    %343 = vst [vmem:[#allocation4 + $0xa0] sm:$0xff] %v236
    %344 = vst [vmem:[#allocation4 + $0xa8] sm:$0xff] %v238
    %345 = vst [vmem:[#allocation4 + $0xb0] sm:$0xff] %v309
    %346 = vst [vmem:[#allocation4 + $0xb8] sm:$0xff] %v311
    %347 = vst [vmem:[#allocation4 + $0xc0] sm:$0xff] %v242
    %348 = vst [vmem:[#allocation4 + $0xc8] sm:$0xff] %v244
    %349 = vst [vmem:[#allocation4 + $0xd0] sm:$0xff] %v315
    %350 = vst [vmem:[#allocation4 + $0xd8] sm:$0xff] %v317
    %351 = vst [vmem:[#allocation4 + $0xe0] sm:$0xff] %v246
    %352 = vst [vmem:[#allocation4 + $0xe8] sm:$0xff] %v248
    %353 = vst [vmem:[#allocation4 + $0xf0] sm:$0xff] %v319
    %354 = vst [vmem:[#allocation4 + $0xf8] sm:$0xff] %v321
    %v355 = vld [vmem:[#allocation2] sm:$0xff]
    %v356 = vld [vmem:[#allocation3] sm:$0xff]
    %s357 = smul.u32 0, 4
    %s358 = smul.addr %s357, 8
    %s359 = scalar_lea.vmem [#allocation4], %s358
    %v360 = vld [vmem:[%s359] sm:$0xff]
    %v361 = vld [vmem:[%s359 + $0x8] sm:$0xff]
    %v362 = vld [vmem:[%s359 + $0x10] sm:$0xff]
    %v363 = vld [vmem:[%s359 + $0x18] sm:$0xff]
    %v364 = vpack.c.bf16 %v355, %v355
    %v365 = vld [vmem:[#allocation10] sm:$0xff]
    %v366 = vld [vmem:[#allocation10 + $0x8] sm:$0xff]
    %v367 = vld [vmem:[#allocation10 + $0x10] sm:$0xff]
    %v368 = vld [vmem:[#allocation10 + $0x18] sm:$0xff]
    %v369 = vld [vmem:[#allocation10 + $0x20] sm:$0xff]
    %v370 = vld [vmem:[#allocation10 + $0x28] sm:$0xff]
    %v371 = vld [vmem:[#allocation10 + $0x30] sm:$0xff]
    %v372 = vld [vmem:[#allocation10 + $0x38] sm:$0xff]
    %v373 = vld [vmem:[#allocation10 + $0x40] sm:$0xff]
    %v374 = vld [vmem:[#allocation10 + $0x48] sm:$0xff]
    %v375 = vld [vmem:[#allocation10 + $0x50] sm:$0xff]
    %v376 = vld [vmem:[#allocation10 + $0x58] sm:$0xff]
    %v377 = vld [vmem:[#allocation10 + $0x60] sm:$0xff]
    %v378 = vld [vmem:[#allocation10 + $0x68] sm:$0xff]
    %v379 = vld [vmem:[#allocation10 + $0x70] sm:$0xff]
    %v380 = vld [vmem:[#allocation10 + $0x78] sm:$0xff]
    %v381 = vld [vmem:[#allocation10 + $0x80] sm:$0xff]
    %v382 = vld [vmem:[#allocation10 + $0x88] sm:$0xff]
    %v383 = vld [vmem:[#allocation10 + $0x90] sm:$0xff]
    %v384 = vld [vmem:[#allocation10 + $0x98] sm:$0xff]
    %v385 = vld [vmem:[#allocation10 + $0xa0] sm:$0xff]
    %v386 = vld [vmem:[#allocation10 + $0xa8] sm:$0xff]
    %v387 = vld [vmem:[#allocation10 + $0xb0] sm:$0xff]
    %v388 = vld [vmem:[#allocation10 + $0xb8] sm:$0xff]
    %v389 = vld [vmem:[#allocation10 + $0xc0] sm:$0xff]
    %v390 = vld [vmem:[#allocation10 + $0xc8] sm:$0xff]
    %v391 = vld [vmem:[#allocation10 + $0xd0] sm:$0xff]
    %v392 = vld [vmem:[#allocation10 + $0xd8] sm:$0xff]
    %v393 = vld [vmem:[#allocation10 + $0xe0] sm:$0xff]
    %v394 = vld [vmem:[#allocation10 + $0xe8] sm:$0xff]
    %v395 = vld [vmem:[#allocation10 + $0xf0] sm:$0xff]
    %v396 = vld [vmem:[#allocation10 + $0xf8] sm:$0xff]
    %v429 = vunpack.c.l.b16 %v365
    %v430 = vunpack.c.h.b16 %v365
    %v431 = vunpack.c.l.b16 %v366
    %v432 = vunpack.c.h.b16 %v366
    %v433 = vunpack.c.l.b16 %v367
    %v434 = vunpack.c.h.b16 %v367
    %v435 = vunpack.c.l.b16 %v368
    %v436 = vunpack.c.h.b16 %v368
    %v437 = vunpack.c.l.b16 %v369
    %v438 = vunpack.c.h.b16 %v369
    %v439 = vunpack.c.l.b16 %v370
    %v440 = vunpack.c.h.b16 %v370
    %v441 = vunpack.c.l.b16 %v371
    %v442 = vunpack.c.h.b16 %v371
    %v443 = vunpack.c.l.b16 %v372
    %v444 = vunpack.c.h.b16 %v372
    %v445 = vunpack.c.l.b16 %v373
    %v446 = vunpack.c.h.b16 %v373
    %v447 = vunpack.c.l.b16 %v374
    %v448 = vunpack.c.h.b16 %v374
    %v449 = vunpack.c.l.b16 %v375
    %v450 = vunpack.c.h.b16 %v375
    %v451 = vunpack.c.l.b16 %v376
    %v452 = vunpack.c.h.b16 %v376
    %v453 = vunpack.c.l.b16 %v377
    %v454 = vunpack.c.h.b16 %v377
    %v455 = vunpack.c.l.b16 %v378
    %v456 = vunpack.c.h.b16 %v378
    %v457 = vunpack.c.l.b16 %v379
    %v458 = vunpack.c.h.b16 %v379
    %v459 = vunpack.c.l.b16 %v380
    %v460 = vunpack.c.h.b16 %v380
    %v461 = vunpack.c.l.b16 %v381
    %v462 = vunpack.c.h.b16 %v381
    %v463 = vunpack.c.l.b16 %v382
    %v464 = vunpack.c.h.b16 %v382
    %v465 = vunpack.c.l.b16 %v383
    %v466 = vunpack.c.h.b16 %v383
    %v467 = vunpack.c.l.b16 %v384
    %v468 = vunpack.c.h.b16 %v384
    %v469 = vunpack.c.l.b16 %v385
    %v470 = vunpack.c.h.b16 %v385
    %v471 = vunpack.c.l.b16 %v386
    %v472 = vunpack.c.h.b16 %v386
    %v473 = vunpack.c.l.b16 %v387
    %v474 = vunpack.c.h.b16 %v387
    %v475 = vunpack.c.l.b16 %v388
    %v476 = vunpack.c.h.b16 %v388
    %v477 = vunpack.c.l.b16 %v389
    %v478 = vunpack.c.h.b16 %v389
    %v479 = vunpack.c.l.b16 %v390
    %v480 = vunpack.c.h.b16 %v390
    %v481 = vunpack.c.l.b16 %v391
    %v482 = vunpack.c.h.b16 %v391
    %v483 = vunpack.c.l.b16 %v392
    %v484 = vunpack.c.h.b16 %v392
    %v485 = vunpack.c.l.b16 %v393
    %v486 = vunpack.c.h.b16 %v393
    %v487 = vunpack.c.l.b16 %v394
    %v488 = vunpack.c.h.b16 %v394
    %v489 = vunpack.c.l.b16 %v395
    %v490 = vunpack.c.h.b16 %v395
    %v491 = vunpack.c.l.b16 %v396
    %v492 = vunpack.c.h.b16 %v396
    %v493 = vpack.c.b16 %v433, %v429
    %v494 = vpack.c.b16 %v434, %v430
    %v495 = vpack.c.b16 %v435, %v431
    %v496 = vpack.c.b16 %v436, %v432
    %v497 = vpack.c.b16 %v441, %v437
    %v498 = vpack.c.b16 %v442, %v438
    %v499 = vpack.c.b16 %v443, %v439
    %v500 = vpack.c.b16 %v444, %v440
    %v501 = vpack.c.b16 %v449, %v445
    %v502 = vpack.c.b16 %v450, %v446
    %v503 = vpack.c.b16 %v451, %v447
    %v504 = vpack.c.b16 %v452, %v448
    %v505 = vpack.c.b16 %v457, %v453
    %v506 = vpack.c.b16 %v458, %v454
    %v507 = vpack.c.b16 %v459, %v455
    %v508 = vpack.c.b16 %v460, %v456
    %v509 = vpack.c.b16 %v465, %v461
    %v510 = vpack.c.b16 %v466, %v462
    %v511 = vpack.c.b16 %v467, %v463
    %v512 = vpack.c.b16 %v468, %v464
    %v513 = vpack.c.b16 %v473, %v469
    %v514 = vpack.c.b16 %v474, %v470
    %v515 = vpack.c.b16 %v475, %v471
    %v516 = vpack.c.b16 %v476, %v472
    %v517 = vpack.c.b16 %v481, %v477
    %v518 = vpack.c.b16 %v482, %v478
    %v519 = vpack.c.b16 %v483, %v479
    %v520 = vpack.c.b16 %v484, %v480
    %v521 = vpack.c.b16 %v489, %v485
    %v522 = vpack.c.b16 %v490, %v486
    %v523 = vpack.c.b16 %v491, %v487
    %v524 = vpack.c.b16 %v492, %v488
    %557 = vmatprep.subr.bf16.mxu0 %v494
    %558 = vmatpush1.bf16.msra.mxu0 %v493
    %559 = vmatprep.subr.bf16.mxu0 %v498
    %560 = vmatpush1.bf16.msra.mxu0 %v497
    %561 = vmatprep.subr.bf16.mxu0 %v502
    %562 = vmatpush1.bf16.msra.mxu0 %v501
    %563 = vmatprep.subr.bf16.mxu0 %v506
    %564 = vmatpush1.bf16.msra.mxu0 %v505
    %565 = vmatprep.subr.bf16.mxu0 %v510
    %566 = vmatpush1.bf16.msra.mxu0 %v509
    %567 = vmatprep.subr.bf16.mxu0 %v514
    %568 = vmatpush1.bf16.msra.mxu0 %v513
    %569 = vmatprep.subr.bf16.mxu0 %v518
    %570 = vmatpush1.bf16.msra.mxu0 %v517
    %571 = vmatprep.subr.bf16.mxu0 %v522
    %572 = vmatpush1.bf16.msra.mxu0 %v521
    %573 = vmatprep.subr.bf16.mxu0 0
    %574 = vmatpush1.bf16.msra.mxu0 0
    %575 = vmatprep.subr.bf16.mxu0 0
    %576 = vmatpush1.bf16.msra.mxu0 0
    %577 = vmatprep.subr.bf16.mxu0 0
    %578 = vmatpush1.bf16.msra.mxu0 0
    %579 = vmatprep.subr.bf16.mxu0 0
    %580 = vmatpush1.bf16.msra.mxu0 0
    %581 = vmatprep.subr.bf16.mxu0 0
    %582 = vmatpush1.bf16.msra.mxu0 0
    %583 = vmatprep.subr.bf16.mxu0 0
    %584 = vmatpush1.bf16.msra.mxu0 0
    %585 = vmatprep.subr.bf16.mxu0 0
    %586 = vmatpush1.bf16.msra.mxu0 0
    %587 = vmatprep.subr.bf16.mxu0 0
    %588 = vmatpush1.bf16.msra.mxu0 0
    %589 = vmatprep.mubr.bf16.mxu0 0
    %590 = vmatmul.mubr.bf16.gmra.mrb[0].mxu0 %v364
    %v591 = vpop.f32.mrb[0].mxu0
    %v592 = vadd.f32 0.0, %v591
    %v593 = vpop.f32.mrb[0].mxu0
    %v594 = vadd.f32 0.0, %v593
    %v595 = vpop.f32.mrb[0].mxu0
    %v596 = vpop.f32.mrb[0].mxu0
    %597 = vdwg.mxu0
    %598 = vmatprep.subr.bf16.mxu0 %v496
    %599 = vmatpush1.bf16.msra.mxu0 %v495
    %600 = vmatprep.subr.bf16.mxu0 %v500
    %601 = vmatpush1.bf16.msra.mxu0 %v499
    %602 = vmatprep.subr.bf16.mxu0 %v504
    %603 = vmatpush1.bf16.msra.mxu0 %v503
    %604 = vmatprep.subr.bf16.mxu0 %v508
    %605 = vmatpush1.bf16.msra.mxu0 %v507
    %606 = vmatprep.subr.bf16.mxu0 %v512
    %607 = vmatpush1.bf16.msra.mxu0 %v511
    %608 = vmatprep.subr.bf16.mxu0 %v516
    %609 = vmatpush1.bf16.msra.mxu0 %v515
    %610 = vmatprep.subr.bf16.mxu0 %v520
    %611 = vmatpush1.bf16.msra.mxu0 %v519
    %612 = vmatprep.subr.bf16.mxu0 %v524
    %613 = vmatpush1.bf16.msra.mxu0 %v523
    %614 = vmatprep.subr.bf16.mxu0 0
    %615 = vmatpush1.bf16.msra.mxu0 0
    %616 = vmatprep.subr.bf16.mxu0 0
    %617 = vmatpush1.bf16.msra.mxu0 0
    %618 = vmatprep.subr.bf16.mxu0 0
    %619 = vmatpush1.bf16.msra.mxu0 0
    %620 = vmatprep.subr.bf16.mxu0 0
    %621 = vmatpush1.bf16.msra.mxu0 0
    %622 = vmatprep.subr.bf16.mxu0 0
    %623 = vmatpush1.bf16.msra.mxu0 0
    %624 = vmatprep.subr.bf16.mxu0 0
    %625 = vmatpush1.bf16.msra.mxu0 0
    %626 = vmatprep.subr.bf16.mxu0 0
    %627 = vmatpush1.bf16.msra.mxu0 0
    %628 = vmatprep.subr.bf16.mxu0 0
    %629 = vmatpush1.bf16.msra.mxu0 0
    %630 = vmatprep.mubr.bf16.mxu0 0
    %631 = vmatmul.mubr.bf16.gmra.mrb[0].mxu0 %v364
    %v632 = vpop.f32.mrb[0].mxu0
    %v633 = vadd.f32 0.0, %v632
    %v634 = vpop.f32.mrb[0].mxu0
    %v635 = vadd.f32 0.0, %v634
    %v636 = vpop.f32.mrb[0].mxu0
    %v637 = vpop.f32.mrb[0].mxu0
    %638 = vdwg.mxu0
    %v639 = vadd.f32 %v360, %v592
    %v640 = vadd.f32 %v361, %v594
    %v641 = vadd.f32 %v362, %v633
    %v642 = vadd.f32 %v363, %v635
    %v643 = vxor.u32 %v639, 2147483648
    %v644 = vmul.f32 %v643, 1.442695
    %v645 = vpow.pop %v644
    %v646 = vadd.f32 %v645, 1.0
    %v647 = vrcp.pop %v646
    %v648 = vmul.f32 1.0, %v647
    %v649 = vxor.u32 %v640, 2147483648
    %v650 = vmul.f32 %v649, 1.442695
    %v651 = vpow.pop %v650
    %v652 = vadd.f32 %v651, 1.0
    %v653 = vrcp.pop %v652
    %v654 = vmul.f32 1.0, %v653
    %v655 = vtanh.pop %v641
    %v656 = vxor.u32 %v642, 2147483648
    %v657 = vmul.f32 %v656, 1.442695
    %v658 = vpow.pop %v657
    %v659 = vadd.f32 %v658, 1.0
    %v660 = vrcp.pop %v659
    %v661 = vmul.f32 1.0, %v660
    %v662 = vmul.f32 %v654, %v356
    %v663 = vmul.f32 %v648, %v655
    %v664 = vadd.f32 %v662, %v663
    %v665 = vtanh.pop %v664
    %v666 = vmul.f32 %v661, %v665
    %s667 = smul.u32 1, 4
    %s668 = smul.addr %s667, 8
    %s669 = scalar_lea.vmem [#allocation4], %s668
    %v670 = vld [vmem:[%s669] sm:$0xff]
    %v671 = vld [vmem:[%s669 + $0x8] sm:$0xff]
    %v672 = vld [vmem:[%s669 + $0x10] sm:$0xff]
    %v673 = vld [vmem:[%s669 + $0x18] sm:$0xff]
    %v674 = vpack.c.bf16 %v666, %v666
    %675 = vmatprep.subr.bf16.mxu0 %v494
    %676 = vmatpush1.bf16.msra.mxu0 %v493
    %677 = vmatprep.subr.bf16.mxu0 %v498
    %678 = vmatpush1.bf16.msra.mxu0 %v497
    %679 = vmatprep.subr.bf16.mxu0 %v502
    %680 = vmatpush1.bf16.msra.mxu0 %v501
    %681 = vmatprep.subr.bf16.mxu0 %v506
    %682 = vmatpush1.bf16.msra.mxu0 %v505
    %683 = vmatprep.subr.bf16.mxu0 %v510
    %684 = vmatpush1.bf16.msra.mxu0 %v509
    %685 = vmatprep.subr.bf16.mxu0 %v514
    %686 = vmatpush1.bf16.msra.mxu0 %v513
    %687 = vmatprep.subr.bf16.mxu0 %v518
    %688 = vmatpush1.bf16.msra.mxu0 %v517
    %689 = vmatprep.subr.bf16.mxu0 %v522
    %690 = vmatpush1.bf16.msra.mxu0 %v521
    %691 = vmatprep.subr.bf16.mxu0 0
    %692 = vmatpush1.bf16.msra.mxu0 0
    %693 = vmatprep.subr.bf16.mxu0 0
    %694 = vmatpush1.bf16.msra.mxu0 0
    %695 = vmatprep.subr.bf16.mxu0 0
    %696 = vmatpush1.bf16.msra.mxu0 0
    %697 = vmatprep.subr.bf16.mxu0 0
    %698 = vmatpush1.bf16.msra.mxu0 0
    %699 = vmatprep.subr.bf16.mxu0 0
    %700 = vmatpush1.bf16.msra.mxu0 0
    %701 = vmatprep.subr.bf16.mxu0 0
    %702 = vmatpush1.bf16.msra.mxu0 0
    %703 = vmatprep.subr.bf16.mxu0 0
    %704 = vmatpush1.bf16.msra.mxu0 0
    %705 = vmatprep.subr.bf16.mxu0 0
    %706 = vmatpush1.bf16.msra.mxu0 0
    %707 = vmatprep.mubr.bf16.mxu0 0
    %708 = vmatmul.mubr.bf16.gmra.mrb[0].mxu0 %v674
    %v709 = vpop.f32.mrb[0].mxu0
    %v710 = vadd.f32 0.0, %v709
    %v711 = vpop.f32.mrb[0].mxu0
    %v712 = vadd.f32 0.0, %v711
    %v713 = vpop.f32.mrb[0].mxu0
    %v714 = vpop.f32.mrb[0].mxu0
    %715 = vdwg.mxu0
    %716 = vmatprep.subr.bf16.mxu0 %v496
    %717 = vmatpush1.bf16.msra.mxu0 %v495
    %718 = vmatprep.subr.bf16.mxu0 %v500
    %719 = vmatpush1.bf16.msra.mxu0 %v499
    %720 = vmatprep.subr.bf16.mxu0 %v504
    %721 = vmatpush1.bf16.msra.mxu0 %v503
    %722 = vmatprep.subr.bf16.mxu0 %v508
    %723 = vmatpush1.bf16.msra.mxu0 %v507
    %724 = vmatprep.subr.bf16.mxu0 %v512
    %725 = vmatpush1.bf16.msra.mxu0 %v511
    %726 = vmatprep.subr.bf16.mxu0 %v516
    %727 = vmatpush1.bf16.msra.mxu0 %v515
    %728 = vmatprep.subr.bf16.mxu0 %v520
    %729 = vmatpush1.bf16.msra.mxu0 %v519
    %730 = vmatprep.subr.bf16.mxu0 %v524
    %731 = vmatpush1.bf16.msra.mxu0 %v523
    %732 = vmatprep.subr.bf16.mxu0 0
    %733 = vmatpush1.bf16.msra.mxu0 0
    %734 = vmatprep.subr.bf16.mxu0 0
    %735 = vmatpush1.bf16.msra.mxu0 0
    %736 = vmatprep.subr.bf16.mxu0 0
    %737 = vmatpush1.bf16.msra.mxu0 0
    %738 = vmatprep.subr.bf16.mxu0 0
    %739 = vmatpush1.bf16.msra.mxu0 0
    %740 = vmatprep.subr.bf16.mxu0 0
    %741 = vmatpush1.bf16.msra.mxu0 0
    %742 = vmatprep.subr.bf16.mxu0 0
    %743 = vmatpush1.bf16.msra.mxu0 0
    %744 = vmatprep.subr.bf16.mxu0 0
    %745 = vmatpush1.bf16.msra.mxu0 0
    %746 = vmatprep.subr.bf16.mxu0 0
    %747 = vmatpush1.bf16.msra.mxu0 0
    %748 = vmatprep.mubr.bf16.mxu0 0
    %749 = vmatmul.mubr.bf16.gmra.mrb[0].mxu0 %v674
    %v750 = vpop.f32.mrb[0].mxu0
    %v751 = vadd.f32 0.0, %v750
    %v752 = vpop.f32.mrb[0].mxu0
    %v753 = vadd.f32 0.0, %v752
    %v754 = vpop.f32.mrb[0].mxu0
    %v755 = vpop.f32.mrb[0].mxu0
    %756 = vdwg.mxu0
    %v757 = vadd.f32 %v670, %v710
    %v758 = vadd.f32 %v671, %v712
    %v759 = vadd.f32 %v672, %v751
    %v760 = vadd.f32 %v673, %v753
    %v761 = vxor.u32 %v757, 2147483648
    %v762 = vmul.f32 %v761, 1.442695
    %v763 = vpow.pop %v762
    %v764 = vadd.f32 %v763, 1.0
    %v765 = vrcp.pop %v764
    %v766 = vmul.f32 1.0, %v765
    %v767 = vxor.u32 %v758, 2147483648
    %v768 = vmul.f32 %v767, 1.442695
    %v769 = vpow.pop %v768
    %v770 = vadd.f32 %v769, 1.0
    %v771 = vrcp.pop %v770
    %v772 = vmul.f32 1.0, %v771
    %v773 = vtanh.pop %v759
    %v774 = vxor.u32 %v760, 2147483648
    %v775 = vmul.f32 %v774, 1.442695
    %v776 = vpow.pop %v775
    %v777 = vadd.f32 %v776, 1.0
    %v778 = vrcp.pop %v777
    %v779 = vmul.f32 1.0, %v778
    %v780 = vmul.f32 %v772, %v664
    %v781 = vmul.f32 %v766, %v773
    %v782 = vadd.f32 %v780, %v781
    %v783 = vtanh.pop %v782
    %v784 = vmul.f32 %v779, %v783
    %s785 = smul.u32 2, 4
    %s786 = smul.addr %s785, 8
    %s787 = scalar_lea.vmem [#allocation4], %s786
    %v788 = vld [vmem:[%s787] sm:$0xff]
    %v789 = vld [vmem:[%s787 + $0x8] sm:$0xff]
    %v790 = vld [vmem:[%s787 + $0x10] sm:$0xff]
    %v791 = vld [vmem:[%s787 + $0x18] sm:$0xff]
    %v792 = vpack.c.bf16 %v784, %v784
    %793 = vmatprep.subr.bf16.mxu0 %v494
    %794 = vmatpush1.bf16.msra.mxu0 %v493
    %795 = vmatprep.subr.bf16.mxu0 %v498
    %796 = vmatpush1.bf16.msra.mxu0 %v497
    %797 = vmatprep.subr.bf16.mxu0 %v502
    %798 = vmatpush1.bf16.msra.mxu0 %v501
    %799 = vmatprep.subr.bf16.mxu0 %v506
    %800 = vmatpush1.bf16.msra.mxu0 %v505
    %801 = vmatprep.subr.bf16.mxu0 %v510
    %802 = vmatpush1.bf16.msra.mxu0 %v509
    %803 = vmatprep.subr.bf16.mxu0 %v514
    %804 = vmatpush1.bf16.msra.mxu0 %v513
    %805 = vmatprep.subr.bf16.mxu0 %v518
    %806 = vmatpush1.bf16.msra.mxu0 %v517
    %807 = vmatprep.subr.bf16.mxu0 %v522
    %808 = vmatpush1.bf16.msra.mxu0 %v521
    %809 = vmatprep.subr.bf16.mxu0 0
    %810 = vmatpush1.bf16.msra.mxu0 0
    %811 = vmatprep.subr.bf16.mxu0 0
    %812 = vmatpush1.bf16.msra.mxu0 0
    %813 = vmatprep.subr.bf16.mxu0 0
    %814 = vmatpush1.bf16.msra.mxu0 0
    %815 = vmatprep.subr.bf16.mxu0 0
    %816 = vmatpush1.bf16.msra.mxu0 0
    %817 = vmatprep.subr.bf16.mxu0 0
    %818 = vmatpush1.bf16.msra.mxu0 0
    %819 = vmatprep.subr.bf16.mxu0 0
    %820 = vmatpush1.bf16.msra.mxu0 0
    %821 = vmatprep.subr.bf16.mxu0 0
    %822 = vmatpush1.bf16.msra.mxu0 0
    %823 = vmatprep.subr.bf16.mxu0 0
    %824 = vmatpush1.bf16.msra.mxu0 0
    %825 = vmatprep.mubr.bf16.mxu0 0
    %826 = vmatmul.mubr.bf16.gmra.mrb[0].mxu0 %v792
    %v827 = vpop.f32.mrb[0].mxu0
    %v828 = vadd.f32 0.0, %v827
    %v829 = vpop.f32.mrb[0].mxu0
    %v830 = vadd.f32 0.0, %v829
    %v831 = vpop.f32.mrb[0].mxu0
    %v832 = vpop.f32.mrb[0].mxu0
    %833 = vdwg.mxu0
    %834 = vmatprep.subr.bf16.mxu0 %v496
    %835 = vmatpush1.bf16.msra.mxu0 %v495
    %836 = vmatprep.subr.bf16.mxu0 %v500
    %837 = vmatpush1.bf16.msra.mxu0 %v499
    %838 = vmatprep.subr.bf16.mxu0 %v504
    %839 = vmatpush1.bf16.msra.mxu0 %v503
    %840 = vmatprep.subr.bf16.mxu0 %v508
    %841 = vmatpush1.bf16.msra.mxu0 %v507
    %842 = vmatprep.subr.bf16.mxu0 %v512
    %843 = vmatpush1.bf16.msra.mxu0 %v511
    %844 = vmatprep.subr.bf16.mxu0 %v516
    %845 = vmatpush1.bf16.msra.mxu0 %v515
    %846 = vmatprep.subr.bf16.mxu0 %v520
    %847 = vmatpush1.bf16.msra.mxu0 %v519
    %848 = vmatprep.subr.bf16.mxu0 %v524
    %849 = vmatpush1.bf16.msra.mxu0 %v523
    %850 = vmatprep.subr.bf16.mxu0 0
    %851 = vmatpush1.bf16.msra.mxu0 0
    %852 = vmatprep.subr.bf16.mxu0 0
    %853 = vmatpush1.bf16.msra.mxu0 0
    %854 = vmatprep.subr.bf16.mxu0 0
    %855 = vmatpush1.bf16.msra.mxu0 0
    %856 = vmatprep.subr.bf16.mxu0 0
    %857 = vmatpush1.bf16.msra.mxu0 0
    %858 = vmatprep.subr.bf16.mxu0 0
    %859 = vmatpush1.bf16.msra.mxu0 0
    %860 = vmatprep.subr.bf16.mxu0 0
    %861 = vmatpush1.bf16.msra.mxu0 0
    %862 = vmatprep.subr.bf16.mxu0 0
    %863 = vmatpush1.bf16.msra.mxu0 0
    %864 = vmatprep.subr.bf16.mxu0 0
    %865 = vmatpush1.bf16.msra.mxu0 0
    %866 = vmatprep.mubr.bf16.mxu0 0
    %867 = vmatmul.mubr.bf16.gmra.mrb[0].mxu0 %v792
    %v868 = vpop.f32.mrb[0].mxu0
    %v869 = vadd.f32 0.0, %v868
    %v870 = vpop.f32.mrb[0].mxu0
    %v871 = vadd.f32 0.0, %v870
    %v872 = vpop.f32.mrb[0].mxu0
    %v873 = vpop.f32.mrb[0].mxu0
    %874 = vdwg.mxu0
    %v875 = vadd.f32 %v788, %v828
    %v876 = vadd.f32 %v789, %v830
    %v877 = vadd.f32 %v790, %v869
    %v878 = vadd.f32 %v791, %v871
    %v879 = vxor.u32 %v875, 2147483648
    %v880 = vmul.f32 %v879, 1.442695
    %v881 = vpow.pop %v880
    %v882 = vadd.f32 %v881, 1.0
    %v883 = vrcp.pop %v882
    %v884 = vmul.f32 1.0, %v883
    %v885 = vxor.u32 %v876, 2147483648
    %v886 = vmul.f32 %v885, 1.442695
    %v887 = vpow.pop %v886
    %v888 = vadd.f32 %v887, 1.0
    %v889 = vrcp.pop %v888
    %v890 = vmul.f32 1.0, %v889
    %v891 = vtanh.pop %v877
    %v892 = vxor.u32 %v878, 2147483648
    %v893 = vmul.f32 %v892, 1.442695
    %v894 = vpow.pop %v893
    %v895 = vadd.f32 %v894, 1.0
    %v896 = vrcp.pop %v895
    %v897 = vmul.f32 1.0, %v896
    %v898 = vmul.f32 %v890, %v782
    %v899 = vmul.f32 %v884, %v891
    %v900 = vadd.f32 %v898, %v899
    %v901 = vtanh.pop %v900
    %v902 = vmul.f32 %v897, %v901
    %s903 = smul.u32 3, 4
    %s904 = smul.addr %s903, 8
    %s905 = scalar_lea.vmem [#allocation4], %s904
    %v906 = vld [vmem:[%s905] sm:$0xff]
    %v907 = vld [vmem:[%s905 + $0x8] sm:$0xff]
    %v908 = vld [vmem:[%s905 + $0x10] sm:$0xff]
    %v909 = vld [vmem:[%s905 + $0x18] sm:$0xff]
    %v910 = vpack.c.bf16 %v902, %v902
    %911 = vmatprep.subr.bf16.mxu0 %v494
    %912 = vmatpush1.bf16.msra.mxu0 %v493
    %913 = vmatprep.subr.bf16.mxu0 %v498
    %914 = vmatpush1.bf16.msra.mxu0 %v497
    %915 = vmatprep.subr.bf16.mxu0 %v502
    %916 = vmatpush1.bf16.msra.mxu0 %v501
    %917 = vmatprep.subr.bf16.mxu0 %v506
    %918 = vmatpush1.bf16.msra.mxu0 %v505
    %919 = vmatprep.subr.bf16.mxu0 %v510
    %920 = vmatpush1.bf16.msra.mxu0 %v509
    %921 = vmatprep.subr.bf16.mxu0 %v514
    %922 = vmatpush1.bf16.msra.mxu0 %v513
    %923 = vmatprep.subr.bf16.mxu0 %v518
    %924 = vmatpush1.bf16.msra.mxu0 %v517
    %925 = vmatprep.subr.bf16.mxu0 %v522
    %926 = vmatpush1.bf16.msra.mxu0 %v521
    %927 = vmatprep.subr.bf16.mxu0 0
    %928 = vmatpush1.bf16.msra.mxu0 0
    %929 = vmatprep.subr.bf16.mxu0 0
    %930 = vmatpush1.bf16.msra.mxu0 0
    %931 = vmatprep.subr.bf16.mxu0 0
    %932 = vmatpush1.bf16.msra.mxu0 0
    %933 = vmatprep.subr.bf16.mxu0 0
    %934 = vmatpush1.bf16.msra.mxu0 0
    %935 = vmatprep.subr.bf16.mxu0 0
    %936 = vmatpush1.bf16.msra.mxu0 0
    %937 = vmatprep.subr.bf16.mxu0 0
    %938 = vmatpush1.bf16.msra.mxu0 0
    %939 = vmatprep.subr.bf16.mxu0 0
    %940 = vmatpush1.bf16.msra.mxu0 0
    %941 = vmatprep.subr.bf16.mxu0 0
    %942 = vmatpush1.bf16.msra.mxu0 0
    %943 = vmatprep.mubr.bf16.mxu0 0
    %944 = vmatmul.mubr.bf16.gmra.mrb[0].mxu0 %v910
    %v945 = vpop.f32.mrb[0].mxu0
    %v946 = vadd.f32 0.0, %v945
    %v947 = vpop.f32.mrb[0].mxu0
    %v948 = vadd.f32 0.0, %v947
    %v949 = vpop.f32.mrb[0].mxu0
    %v950 = vpop.f32.mrb[0].mxu0
    %951 = vdwg.mxu0
    %952 = vmatprep.subr.bf16.mxu0 %v496
    %953 = vmatpush1.bf16.msra.mxu0 %v495
    %954 = vmatprep.subr.bf16.mxu0 %v500
    %955 = vmatpush1.bf16.msra.mxu0 %v499
    %956 = vmatprep.subr.bf16.mxu0 %v504
    %957 = vmatpush1.bf16.msra.mxu0 %v503
    %958 = vmatprep.subr.bf16.mxu0 %v508
    %959 = vmatpush1.bf16.msra.mxu0 %v507
    %960 = vmatprep.subr.bf16.mxu0 %v512
    %961 = vmatpush1.bf16.msra.mxu0 %v511
    %962 = vmatprep.subr.bf16.mxu0 %v516
    %963 = vmatpush1.bf16.msra.mxu0 %v515
    %964 = vmatprep.subr.bf16.mxu0 %v520
    %965 = vmatpush1.bf16.msra.mxu0 %v519
    %966 = vmatprep.subr.bf16.mxu0 %v524
    %967 = vmatpush1.bf16.msra.mxu0 %v523
    %968 = vmatprep.subr.bf16.mxu0 0
    %969 = vmatpush1.bf16.msra.mxu0 0
    %970 = vmatprep.subr.bf16.mxu0 0
    %971 = vmatpush1.bf16.msra.mxu0 0
    %972 = vmatprep.subr.bf16.mxu0 0
    %973 = vmatpush1.bf16.msra.mxu0 0
    %974 = vmatprep.subr.bf16.mxu0 0
    %975 = vmatpush1.bf16.msra.mxu0 0
    %976 = vmatprep.subr.bf16.mxu0 0
    %977 = vmatpush1.bf16.msra.mxu0 0
    %978 = vmatprep.subr.bf16.mxu0 0
    %979 = vmatpush1.bf16.msra.mxu0 0
    %980 = vmatprep.subr.bf16.mxu0 0
    %981 = vmatpush1.bf16.msra.mxu0 0
    %982 = vmatprep.subr.bf16.mxu0 0
    %983 = vmatpush1.bf16.msra.mxu0 0
    %984 = vmatprep.mubr.bf16.mxu0 0
    %985 = vmatmul.mubr.bf16.gmra.mrb[0].mxu0 %v910
    %v986 = vpop.f32.mrb[0].mxu0
    %v987 = vadd.f32 0.0, %v986
    %v988 = vpop.f32.mrb[0].mxu0
    %v989 = vadd.f32 0.0, %v988
    %v990 = vpop.f32.mrb[0].mxu0
    %v991 = vpop.f32.mrb[0].mxu0
    %992 = vdwg.mxu0
    %v993 = vadd.f32 %v906, %v946
    %v994 = vadd.f32 %v907, %v948
    %v995 = vadd.f32 %v908, %v987
    %v996 = vadd.f32 %v909, %v989
    %v997 = vxor.u32 %v993, 2147483648
    %v998 = vmul.f32 %v997, 1.442695
    %v999 = vpow.pop %v998
    %v1000 = vadd.f32 %v999, 1.0
    %v1001 = vrcp.pop %v1000
    %v1002 = vmul.f32 1.0, %v1001
    %v1003 = vxor.u32 %v994, 2147483648
    %v1004 = vmul.f32 %v1003, 1.442695
    %v1005 = vpow.pop %v1004
    %v1006 = vadd.f32 %v1005, 1.0
    %v1007 = vrcp.pop %v1006
    %v1008 = vmul.f32 1.0, %v1007
    %v1009 = vtanh.pop %v995
    %v1010 = vxor.u32 %v996, 2147483648
    %v1011 = vmul.f32 %v1010, 1.442695
    %v1012 = vpow.pop %v1011
    %v1013 = vadd.f32 %v1012, 1.0
    %v1014 = vrcp.pop %v1013
    %v1015 = vmul.f32 1.0, %v1014
    %v1016 = vmul.f32 %v1008, %v900
    %v1017 = vmul.f32 %v1002, %v1009
    %v1018 = vadd.f32 %v1016, %v1017
    %v1019 = vtanh.pop %v1018
    %v1020 = vmul.f32 %v1015, %v1019
    %s1021 = smul.u32 4, 4
    %s1022 = smul.addr %s1021, 8
    %s1023 = scalar_lea.vmem [#allocation4], %s1022
    %v1024 = vld [vmem:[%s1023] sm:$0xff]
    %v1025 = vld [vmem:[%s1023 + $0x8] sm:$0xff]
    %v1026 = vld [vmem:[%s1023 + $0x10] sm:$0xff]
    %v1027 = vld [vmem:[%s1023 + $0x18] sm:$0xff]
    %v1028 = vpack.c.bf16 %v1020, %v1020
    %1029 = vmatprep.subr.bf16.mxu0 %v494
    %1030 = vmatpush1.bf16.msra.mxu0 %v493
    %1031 = vmatprep.subr.bf16.mxu0 %v498
    %1032 = vmatpush1.bf16.msra.mxu0 %v497
    %1033 = vmatprep.subr.bf16.mxu0 %v502
    %1034 = vmatpush1.bf16.msra.mxu0 %v501
    %1035 = vmatprep.subr.bf16.mxu0 %v506
    %1036 = vmatpush1.bf16.msra.mxu0 %v505
    %1037 = vmatprep.subr.bf16.mxu0 %v510
    %1038 = vmatpush1.bf16.msra.mxu0 %v509
    %1039 = vmatprep.subr.bf16.mxu0 %v514
    %1040 = vmatpush1.bf16.msra.mxu0 %v513
    %1041 = vmatprep.subr.bf16.mxu0 %v518
    %1042 = vmatpush1.bf16.msra.mxu0 %v517
    %1043 = vmatprep.subr.bf16.mxu0 %v522
    %1044 = vmatpush1.bf16.msra.mxu0 %v521
    %1045 = vmatprep.subr.bf16.mxu0 0
    %1046 = vmatpush1.bf16.msra.mxu0 0
    %1047 = vmatprep.subr.bf16.mxu0 0
    %1048 = vmatpush1.bf16.msra.mxu0 0
    %1049 = vmatprep.subr.bf16.mxu0 0
    %1050 = vmatpush1.bf16.msra.mxu0 0
    %1051 = vmatprep.subr.bf16.mxu0 0
    %1052 = vmatpush1.bf16.msra.mxu0 0
    %1053 = vmatprep.subr.bf16.mxu0 0
    %1054 = vmatpush1.bf16.msra.mxu0 0
    %1055 = vmatprep.subr.bf16.mxu0 0
    %1056 = vmatpush1.bf16.msra.mxu0 0
    %1057 = vmatprep.subr.bf16.mxu0 0
    %1058 = vmatpush1.bf16.msra.mxu0 0
    %1059 = vmatprep.subr.bf16.mxu0 0
    %1060 = vmatpush1.bf16.msra.mxu0 0
    %1061 = vmatprep.mubr.bf16.mxu0 0
    %1062 = vmatmul.mubr.bf16.gmra.mrb[0].mxu0 %v1028
    %v1063 = vpop.f32.mrb[0].mxu0
    %v1064 = vadd.f32 0.0, %v1063
    %v1065 = vpop.f32.mrb[0].mxu0
    %v1066 = vadd.f32 0.0, %v1065
    %v1067 = vpop.f32.mrb[0].mxu0
    %v1068 = vpop.f32.mrb[0].mxu0
    %1069 = vdwg.mxu0
    %1070 = vmatprep.subr.bf16.mxu0 %v496
    %1071 = vmatpush1.bf16.msra.mxu0 %v495
    %1072 = vmatprep.subr.bf16.mxu0 %v500
    %1073 = vmatpush1.bf16.msra.mxu0 %v499
    %1074 = vmatprep.subr.bf16.mxu0 %v504
    %1075 = vmatpush1.bf16.msra.mxu0 %v503
    %1076 = vmatprep.subr.bf16.mxu0 %v508
    %1077 = vmatpush1.bf16.msra.mxu0 %v507
    %1078 = vmatprep.subr.bf16.mxu0 %v512
    %1079 = vmatpush1.bf16.msra.mxu0 %v511
    %1080 = vmatprep.subr.bf16.mxu0 %v516
    %1081 = vmatpush1.bf16.msra.mxu0 %v515
    %1082 = vmatprep.subr.bf16.mxu0 %v520
    %1083 = vmatpush1.bf16.msra.mxu0 %v519
    %1084 = vmatprep.subr.bf16.mxu0 %v524
    %1085 = vmatpush1.bf16.msra.mxu0 %v523
    %1086 = vmatprep.subr.bf16.mxu0 0
    %1087 = vmatpush1.bf16.msra.mxu0 0
    %1088 = vmatprep.subr.bf16.mxu0 0
    %1089 = vmatpush1.bf16.msra.mxu0 0
    %1090 = vmatprep.subr.bf16.mxu0 0
    %1091 = vmatpush1.bf16.msra.mxu0 0
    %1092 = vmatprep.subr.bf16.mxu0 0
    %1093 = vmatpush1.bf16.msra.mxu0 0
    %1094 = vmatprep.subr.bf16.mxu0 0
    %1095 = vmatpush1.bf16.msra.mxu0 0
    %1096 = vmatprep.subr.bf16.mxu0 0
    %1097 = vmatpush1.bf16.msra.mxu0 0
    %1098 = vmatprep.subr.bf16.mxu0 0
    %1099 = vmatpush1.bf16.msra.mxu0 0
    %1100 = vmatprep.subr.bf16.mxu0 0
    %1101 = vmatpush1.bf16.msra.mxu0 0
    %1102 = vmatprep.mubr.bf16.mxu0 0
    %1103 = vmatmul.mubr.bf16.gmra.mrb[0].mxu0 %v1028
    %v1104 = vpop.f32.mrb[0].mxu0
    %v1105 = vadd.f32 0.0, %v1104
    %v1106 = vpop.f32.mrb[0].mxu0
    %v1107 = vadd.f32 0.0, %v1106
    %v1108 = vpop.f32.mrb[0].mxu0
    %v1109 = vpop.f32.mrb[0].mxu0
    %1110 = vdwg.mxu0
    %v1111 = vadd.f32 %v1024, %v1064
    %v1112 = vadd.f32 %v1025, %v1066
    %v1113 = vadd.f32 %v1026, %v1105
    %v1114 = vadd.f32 %v1027, %v1107
    %v1115 = vxor.u32 %v1111, 2147483648
    %v1116 = vmul.f32 %v1115, 1.442695
    %v1117 = vpow.pop %v1116
    %v1118 = vadd.f32 %v1117, 1.0
    %v1119 = vrcp.pop %v1118
    %v1120 = vmul.f32 1.0, %v1119
    %v1121 = vxor.u32 %v1112, 2147483648
    %v1122 = vmul.f32 %v1121, 1.442695
    %v1123 = vpow.pop %v1122
    %v1124 = vadd.f32 %v1123, 1.0
    %v1125 = vrcp.pop %v1124
    %v1126 = vmul.f32 1.0, %v1125
    %v1127 = vtanh.pop %v1113
    %v1128 = vxor.u32 %v1114, 2147483648
    %v1129 = vmul.f32 %v1128, 1.442695
    %v1130 = vpow.pop %v1129
    %v1131 = vadd.f32 %v1130, 1.0
    %v1132 = vrcp.pop %v1131
    %v1133 = vmul.f32 1.0, %v1132
    %v1134 = vmul.f32 %v1126, %v1018
    %v1135 = vmul.f32 %v1120, %v1127
    %v1136 = vadd.f32 %v1134, %v1135
    %v1137 = vtanh.pop %v1136
    %v1138 = vmul.f32 %v1133, %v1137
    %s1139 = smul.u32 5, 4
    %s1140 = smul.addr %s1139, 8
    %s1141 = scalar_lea.vmem [#allocation4], %s1140
    %v1142 = vld [vmem:[%s1141] sm:$0xff]
    %v1143 = vld [vmem:[%s1141 + $0x8] sm:$0xff]
    %v1144 = vld [vmem:[%s1141 + $0x10] sm:$0xff]
    %v1145 = vld [vmem:[%s1141 + $0x18] sm:$0xff]
    %v1146 = vpack.c.bf16 %v1138, %v1138
    %1147 = vmatprep.subr.bf16.mxu0 %v494
    %1148 = vmatpush1.bf16.msra.mxu0 %v493
    %1149 = vmatprep.subr.bf16.mxu0 %v498
    %1150 = vmatpush1.bf16.msra.mxu0 %v497
    %1151 = vmatprep.subr.bf16.mxu0 %v502
    %1152 = vmatpush1.bf16.msra.mxu0 %v501
    %1153 = vmatprep.subr.bf16.mxu0 %v506
    %1154 = vmatpush1.bf16.msra.mxu0 %v505
    %1155 = vmatprep.subr.bf16.mxu0 %v510
    %1156 = vmatpush1.bf16.msra.mxu0 %v509
    %1157 = vmatprep.subr.bf16.mxu0 %v514
    %1158 = vmatpush1.bf16.msra.mxu0 %v513
    %1159 = vmatprep.subr.bf16.mxu0 %v518
    %1160 = vmatpush1.bf16.msra.mxu0 %v517
    %1161 = vmatprep.subr.bf16.mxu0 %v522
    %1162 = vmatpush1.bf16.msra.mxu0 %v521
    %1163 = vmatprep.subr.bf16.mxu0 0
    %1164 = vmatpush1.bf16.msra.mxu0 0
    %1165 = vmatprep.subr.bf16.mxu0 0
    %1166 = vmatpush1.bf16.msra.mxu0 0
    %1167 = vmatprep.subr.bf16.mxu0 0
    %1168 = vmatpush1.bf16.msra.mxu0 0
    %1169 = vmatprep.subr.bf16.mxu0 0
    %1170 = vmatpush1.bf16.msra.mxu0 0
    %1171 = vmatprep.subr.bf16.mxu0 0
    %1172 = vmatpush1.bf16.msra.mxu0 0
    %1173 = vmatprep.subr.bf16.mxu0 0
    %1174 = vmatpush1.bf16.msra.mxu0 0
    %1175 = vmatprep.subr.bf16.mxu0 0
    %1176 = vmatpush1.bf16.msra.mxu0 0
    %1177 = vmatprep.subr.bf16.mxu0 0
    %1178 = vmatpush1.bf16.msra.mxu0 0
    %1179 = vmatprep.mubr.bf16.mxu0 0
    %1180 = vmatmul.mubr.bf16.gmra.mrb[0].mxu0 %v1146
    %v1181 = vpop.f32.mrb[0].mxu0
    %v1182 = vadd.f32 0.0, %v1181
    %v1183 = vpop.f32.mrb[0].mxu0
    %v1184 = vadd.f32 0.0, %v1183
    %v1185 = vpop.f32.mrb[0].mxu0
    %v1186 = vpop.f32.mrb[0].mxu0
    %1187 = vdwg.mxu0
    %1188 = vmatprep.subr.bf16.mxu0 %v496
    %1189 = vmatpush1.bf16.msra.mxu0 %v495
    %1190 = vmatprep.subr.bf16.mxu0 %v500
    %1191 = vmatpush1.bf16.msra.mxu0 %v499
    %1192 = vmatprep.subr.bf16.mxu0 %v504
    %1193 = vmatpush1.bf16.msra.mxu0 %v503
    %1194 = vmatprep.subr.bf16.mxu0 %v508
    %1195 = vmatpush1.bf16.msra.mxu0 %v507
    %1196 = vmatprep.subr.bf16.mxu0 %v512
    %1197 = vmatpush1.bf16.msra.mxu0 %v511
    %1198 = vmatprep.subr.bf16.mxu0 %v516
    %1199 = vmatpush1.bf16.msra.mxu0 %v515
    %1200 = vmatprep.subr.bf16.mxu0 %v520
    %1201 = vmatpush1.bf16.msra.mxu0 %v519
    %1202 = vmatprep.subr.bf16.mxu0 %v524
    %1203 = vmatpush1.bf16.msra.mxu0 %v523
    %1204 = vmatprep.subr.bf16.mxu0 0
    %1205 = vmatpush1.bf16.msra.mxu0 0
    %1206 = vmatprep.subr.bf16.mxu0 0
    %1207 = vmatpush1.bf16.msra.mxu0 0
    %1208 = vmatprep.subr.bf16.mxu0 0
    %1209 = vmatpush1.bf16.msra.mxu0 0
    %1210 = vmatprep.subr.bf16.mxu0 0
    %1211 = vmatpush1.bf16.msra.mxu0 0
    %1212 = vmatprep.subr.bf16.mxu0 0
    %1213 = vmatpush1.bf16.msra.mxu0 0
    %1214 = vmatprep.subr.bf16.mxu0 0
    %1215 = vmatpush1.bf16.msra.mxu0 0
    %1216 = vmatprep.subr.bf16.mxu0 0
    %1217 = vmatpush1.bf16.msra.mxu0 0
    %1218 = vmatprep.subr.bf16.mxu0 0
    %1219 = vmatpush1.bf16.msra.mxu0 0
    %1220 = vmatprep.mubr.bf16.mxu0 0
    %1221 = vmatmul.mubr.bf16.gmra.mrb[0].mxu0 %v1146
    %v1222 = vpop.f32.mrb[0].mxu0
    %v1223 = vadd.f32 0.0, %v1222
    %v1224 = vpop.f32.mrb[0].mxu0
    %v1225 = vadd.f32 0.0, %v1224
    %v1226 = vpop.f32.mrb[0].mxu0
    %v1227 = vpop.f32.mrb[0].mxu0
    %1228 = vdwg.mxu0
    %v1229 = vadd.f32 %v1142, %v1182
    %v1230 = vadd.f32 %v1143, %v1184
    %v1231 = vadd.f32 %v1144, %v1223
    %v1232 = vadd.f32 %v1145, %v1225
    %v1233 = vxor.u32 %v1229, 2147483648
    %v1234 = vmul.f32 %v1233, 1.442695
    %v1235 = vpow.pop %v1234
    %v1236 = vadd.f32 %v1235, 1.0
    %v1237 = vrcp.pop %v1236
    %v1238 = vmul.f32 1.0, %v1237
    %v1239 = vxor.u32 %v1230, 2147483648
    %v1240 = vmul.f32 %v1239, 1.442695
    %v1241 = vpow.pop %v1240
    %v1242 = vadd.f32 %v1241, 1.0
    %v1243 = vrcp.pop %v1242
    %v1244 = vmul.f32 1.0, %v1243
    %v1245 = vtanh.pop %v1231
    %v1246 = vxor.u32 %v1232, 2147483648
    %v1247 = vmul.f32 %v1246, 1.442695
    %v1248 = vpow.pop %v1247
    %v1249 = vadd.f32 %v1248, 1.0
    %v1250 = vrcp.pop %v1249
    %v1251 = vmul.f32 1.0, %v1250
    %v1252 = vmul.f32 %v1244, %v1136
    %v1253 = vmul.f32 %v1238, %v1245
    %v1254 = vadd.f32 %v1252, %v1253
    %v1255 = vtanh.pop %v1254
    %v1256 = vmul.f32 %v1251, %v1255
    %s1257 = smul.u32 6, 4
    %s1258 = smul.addr %s1257, 8
    %s1259 = scalar_lea.vmem [#allocation4], %s1258
    %v1260 = vld [vmem:[%s1259] sm:$0xff]
    %v1261 = vld [vmem:[%s1259 + $0x8] sm:$0xff]
    %v1262 = vld [vmem:[%s1259 + $0x10] sm:$0xff]
    %v1263 = vld [vmem:[%s1259 + $0x18] sm:$0xff]
    %v1264 = vpack.c.bf16 %v1256, %v1256
    %1265 = vmatprep.subr.bf16.mxu0 %v494
    %1266 = vmatpush1.bf16.msra.mxu0 %v493
    %1267 = vmatprep.subr.bf16.mxu0 %v498
    %1268 = vmatpush1.bf16.msra.mxu0 %v497
    %1269 = vmatprep.subr.bf16.mxu0 %v502
    %1270 = vmatpush1.bf16.msra.mxu0 %v501
    %1271 = vmatprep.subr.bf16.mxu0 %v506
    %1272 = vmatpush1.bf16.msra.mxu0 %v505
    %1273 = vmatprep.subr.bf16.mxu0 %v510
    %1274 = vmatpush1.bf16.msra.mxu0 %v509
    %1275 = vmatprep.subr.bf16.mxu0 %v514
    %1276 = vmatpush1.bf16.msra.mxu0 %v513
    %1277 = vmatprep.subr.bf16.mxu0 %v518
    %1278 = vmatpush1.bf16.msra.mxu0 %v517
    %1279 = vmatprep.subr.bf16.mxu0 %v522
    %1280 = vmatpush1.bf16.msra.mxu0 %v521
    %1281 = vmatprep.subr.bf16.mxu0 0
    %1282 = vmatpush1.bf16.msra.mxu0 0
    %1283 = vmatprep.subr.bf16.mxu0 0
    %1284 = vmatpush1.bf16.msra.mxu0 0
    %1285 = vmatprep.subr.bf16.mxu0 0
    %1286 = vmatpush1.bf16.msra.mxu0 0
    %1287 = vmatprep.subr.bf16.mxu0 0
    %1288 = vmatpush1.bf16.msra.mxu0 0
    %1289 = vmatprep.subr.bf16.mxu0 0
    %1290 = vmatpush1.bf16.msra.mxu0 0
    %1291 = vmatprep.subr.bf16.mxu0 0
    %1292 = vmatpush1.bf16.msra.mxu0 0
    %1293 = vmatprep.subr.bf16.mxu0 0
    %1294 = vmatpush1.bf16.msra.mxu0 0
    %1295 = vmatprep.subr.bf16.mxu0 0
    %1296 = vmatpush1.bf16.msra.mxu0 0
    %1297 = vmatprep.mubr.bf16.mxu0 0
    %1298 = vmatmul.mubr.bf16.gmra.mrb[0].mxu0 %v1264
    %v1299 = vpop.f32.mrb[0].mxu0
    %v1300 = vadd.f32 0.0, %v1299
    %v1301 = vpop.f32.mrb[0].mxu0
    %v1302 = vadd.f32 0.0, %v1301
    %v1303 = vpop.f32.mrb[0].mxu0
    %v1304 = vpop.f32.mrb[0].mxu0
    %1305 = vdwg.mxu0
    %1306 = vmatprep.subr.bf16.mxu0 %v496
    %1307 = vmatpush1.bf16.msra.mxu0 %v495
    %1308 = vmatprep.subr.bf16.mxu0 %v500
    %1309 = vmatpush1.bf16.msra.mxu0 %v499
    %1310 = vmatprep.subr.bf16.mxu0 %v504
    %1311 = vmatpush1.bf16.msra.mxu0 %v503
    %1312 = vmatprep.subr.bf16.mxu0 %v508
    %1313 = vmatpush1.bf16.msra.mxu0 %v507
    %1314 = vmatprep.subr.bf16.mxu0 %v512
    %1315 = vmatpush1.bf16.msra.mxu0 %v511
    %1316 = vmatprep.subr.bf16.mxu0 %v516
    %1317 = vmatpush1.bf16.msra.mxu0 %v515
    %1318 = vmatprep.subr.bf16.mxu0 %v520
    %1319 = vmatpush1.bf16.msra.mxu0 %v519
    %1320 = vmatprep.subr.bf16.mxu0 %v524
    %1321 = vmatpush1.bf16.msra.mxu0 %v523
    %1322 = vmatprep.subr.bf16.mxu0 0
    %1323 = vmatpush1.bf16.msra.mxu0 0
    %1324 = vmatprep.subr.bf16.mxu0 0
    %1325 = vmatpush1.bf16.msra.mxu0 0
    %1326 = vmatprep.subr.bf16.mxu0 0
    %1327 = vmatpush1.bf16.msra.mxu0 0
    %1328 = vmatprep.subr.bf16.mxu0 0
    %1329 = vmatpush1.bf16.msra.mxu0 0
    %1330 = vmatprep.subr.bf16.mxu0 0
    %1331 = vmatpush1.bf16.msra.mxu0 0
    %1332 = vmatprep.subr.bf16.mxu0 0
    %1333 = vmatpush1.bf16.msra.mxu0 0
    %1334 = vmatprep.subr.bf16.mxu0 0
    %1335 = vmatpush1.bf16.msra.mxu0 0
    %1336 = vmatprep.subr.bf16.mxu0 0
    %1337 = vmatpush1.bf16.msra.mxu0 0
    %1338 = vmatprep.mubr.bf16.mxu0 0
    %1339 = vmatmul.mubr.bf16.gmra.mrb[0].mxu0 %v1264
    %v1340 = vpop.f32.mrb[0].mxu0
    %v1341 = vadd.f32 0.0, %v1340
    %v1342 = vpop.f32.mrb[0].mxu0
    %v1343 = vadd.f32 0.0, %v1342
    %v1344 = vpop.f32.mrb[0].mxu0
    %v1345 = vpop.f32.mrb[0].mxu0
    %1346 = vdwg.mxu0
    %v1347 = vadd.f32 %v1260, %v1300
    %v1348 = vadd.f32 %v1261, %v1302
    %v1349 = vadd.f32 %v1262, %v1341
    %v1350 = vadd.f32 %v1263, %v1343
    %v1351 = vxor.u32 %v1347, 2147483648
    %v1352 = vmul.f32 %v1351, 1.442695
    %v1353 = vpow.pop %v1352
    %v1354 = vadd.f32 %v1353, 1.0
    %v1355 = vrcp.pop %v1354
    %v1356 = vmul.f32 1.0, %v1355
    %v1357 = vxor.u32 %v1348, 2147483648
    %v1358 = vmul.f32 %v1357, 1.442695
    %v1359 = vpow.pop %v1358
    %v1360 = vadd.f32 %v1359, 1.0
    %v1361 = vrcp.pop %v1360
    %v1362 = vmul.f32 1.0, %v1361
    %v1363 = vtanh.pop %v1349
    %v1364 = vxor.u32 %v1350, 2147483648
    %v1365 = vmul.f32 %v1364, 1.442695
    %v1366 = vpow.pop %v1365
    %v1367 = vadd.f32 %v1366, 1.0
    %v1368 = vrcp.pop %v1367
    %v1369 = vmul.f32 1.0, %v1368
    %v1370 = vmul.f32 %v1362, %v1254
    %v1371 = vmul.f32 %v1356, %v1363
    %v1372 = vadd.f32 %v1370, %v1371
    %v1373 = vtanh.pop %v1372
    %v1374 = vmul.f32 %v1369, %v1373
    %s1375 = smul.u32 7, 4
    %s1376 = smul.addr %s1375, 8
    %s1377 = scalar_lea.vmem [#allocation4], %s1376
    %v1378 = vld [vmem:[%s1377] sm:$0xff]
    %v1379 = vld [vmem:[%s1377 + $0x8] sm:$0xff]
    %v1380 = vld [vmem:[%s1377 + $0x10] sm:$0xff]
    %v1381 = vld [vmem:[%s1377 + $0x18] sm:$0xff]
    %v1382 = vpack.c.bf16 %v1374, %v1374
    %1383 = vmatprep.subr.bf16.mxu0 %v494
    %1384 = vmatpush1.bf16.msra.mxu0 %v493
    %1385 = vmatprep.subr.bf16.mxu0 %v498
    %1386 = vmatpush1.bf16.msra.mxu0 %v497
    %1387 = vmatprep.subr.bf16.mxu0 %v502
    %1388 = vmatpush1.bf16.msra.mxu0 %v501
    %1389 = vmatprep.subr.bf16.mxu0 %v506
    %1390 = vmatpush1.bf16.msra.mxu0 %v505
    %1391 = vmatprep.subr.bf16.mxu0 %v510
    %1392 = vmatpush1.bf16.msra.mxu0 %v509
    %1393 = vmatprep.subr.bf16.mxu0 %v514
    %1394 = vmatpush1.bf16.msra.mxu0 %v513
    %1395 = vmatprep.subr.bf16.mxu0 %v518
    %1396 = vmatpush1.bf16.msra.mxu0 %v517
    %1397 = vmatprep.subr.bf16.mxu0 %v522
    %1398 = vmatpush1.bf16.msra.mxu0 %v521
    %1399 = vmatprep.subr.bf16.mxu0 0
    %1400 = vmatpush1.bf16.msra.mxu0 0
    %1401 = vmatprep.subr.bf16.mxu0 0
    %1402 = vmatpush1.bf16.msra.mxu0 0
    %1403 = vmatprep.subr.bf16.mxu0 0
    %1404 = vmatpush1.bf16.msra.mxu0 0
    %1405 = vmatprep.subr.bf16.mxu0 0
    %1406 = vmatpush1.bf16.msra.mxu0 0
    %1407 = vmatprep.subr.bf16.mxu0 0
    %1408 = vmatpush1.bf16.msra.mxu0 0
    %1409 = vmatprep.subr.bf16.mxu0 0
    %1410 = vmatpush1.bf16.msra.mxu0 0
    %1411 = vmatprep.subr.bf16.mxu0 0
    %1412 = vmatpush1.bf16.msra.mxu0 0
    %1413 = vmatprep.subr.bf16.mxu0 0
    %1414 = vmatpush1.bf16.msra.mxu0 0
    %1415 = vmatprep.mubr.bf16.mxu0 0
    %1416 = vmatmul.mubr.bf16.gmra.mrb[0].mxu0 %v1382
    %v1417 = vpop.f32.mrb[0].mxu0
    %v1418 = vadd.f32 0.0, %v1417
    %v1419 = vpop.f32.mrb[0].mxu0
    %v1420 = vadd.f32 0.0, %v1419
    %v1421 = vpop.f32.mrb[0].mxu0
    %v1422 = vpop.f32.mrb[0].mxu0
    %1423 = vdwg.mxu0
    %1424 = vmatprep.subr.bf16.mxu0 %v496
    %1425 = vmatpush1.bf16.msra.mxu0 %v495
    %1426 = vmatprep.subr.bf16.mxu0 %v500
    %1427 = vmatpush1.bf16.msra.mxu0 %v499
    %1428 = vmatprep.subr.bf16.mxu0 %v504
    %1429 = vmatpush1.bf16.msra.mxu0 %v503
    %1430 = vmatprep.subr.bf16.mxu0 %v508
    %1431 = vmatpush1.bf16.msra.mxu0 %v507
    %1432 = vmatprep.subr.bf16.mxu0 %v512
    %1433 = vmatpush1.bf16.msra.mxu0 %v511
    %1434 = vmatprep.subr.bf16.mxu0 %v516
    %1435 = vmatpush1.bf16.msra.mxu0 %v515
    %1436 = vmatprep.subr.bf16.mxu0 %v520
    %1437 = vmatpush1.bf16.msra.mxu0 %v519
    %1438 = vmatprep.subr.bf16.mxu0 %v524
    %1439 = vmatpush1.bf16.msra.mxu0 %v523
    %1440 = vmatprep.subr.bf16.mxu0 0
    %1441 = vmatpush1.bf16.msra.mxu0 0
    %1442 = vmatprep.subr.bf16.mxu0 0
    %1443 = vmatpush1.bf16.msra.mxu0 0
    %1444 = vmatprep.subr.bf16.mxu0 0
    %1445 = vmatpush1.bf16.msra.mxu0 0
    %1446 = vmatprep.subr.bf16.mxu0 0
    %1447 = vmatpush1.bf16.msra.mxu0 0
    %1448 = vmatprep.subr.bf16.mxu0 0
    %1449 = vmatpush1.bf16.msra.mxu0 0
    %1450 = vmatprep.subr.bf16.mxu0 0
    %1451 = vmatpush1.bf16.msra.mxu0 0
    %1452 = vmatprep.subr.bf16.mxu0 0
    %1453 = vmatpush1.bf16.msra.mxu0 0
    %1454 = vmatprep.subr.bf16.mxu0 0
    %1455 = vmatpush1.bf16.msra.mxu0 0
    %1456 = vmatprep.mubr.bf16.mxu0 0
    %1457 = vmatmul.mubr.bf16.gmra.mrb[0].mxu0 %v1382
    %v1458 = vpop.f32.mrb[0].mxu0
    %v1459 = vadd.f32 0.0, %v1458
    %v1460 = vpop.f32.mrb[0].mxu0
    %v1461 = vadd.f32 0.0, %v1460
    %v1462 = vpop.f32.mrb[0].mxu0
    %v1463 = vpop.f32.mrb[0].mxu0
    %1464 = vdwg.mxu0
    %v1465 = vadd.f32 %v1378, %v1418
    %v1466 = vadd.f32 %v1379, %v1420
    %v1467 = vadd.f32 %v1380, %v1459
    %v1468 = vadd.f32 %v1381, %v1461
    %v1469 = vxor.u32 %v1465, 2147483648
    %v1470 = vmul.f32 %v1469, 1.442695
    %v1471 = vpow.pop %v1470
    %v1472 = vadd.f32 %v1471, 1.0
    %v1473 = vrcp.pop %v1472
    %v1474 = vmul.f32 1.0, %v1473
    %v1475 = vxor.u32 %v1466, 2147483648
    %v1476 = vmul.f32 %v1475, 1.442695
    %v1477 = vpow.pop %v1476
    %v1478 = vadd.f32 %v1477, 1.0
    %v1479 = vrcp.pop %v1478
    %v1480 = vmul.f32 1.0, %v1479
    %v1481 = vtanh.pop %v1467
    %v1482 = vxor.u32 %v1468, 2147483648
    %v1483 = vmul.f32 %v1482, 1.442695
    %v1484 = vpow.pop %v1483
    %v1485 = vadd.f32 %v1484, 1.0
    %v1486 = vrcp.pop %v1485
    %v1487 = vmul.f32 1.0, %v1486
    %v1488 = vmul.f32 %v1480, %v1372
    %v1489 = vmul.f32 %v1474, %v1481
    %v1490 = vadd.f32 %v1488, %v1489
    %v1491 = vtanh.pop %v1490
    %v1492 = vmul.f32 %v1487, %v1491
    %1493 = vst [vmem:[#allocation2] sm:$0xff] %v1492
    %1494 = vst [vmem:[#allocation3] sm:$0xff] %v1490
    // Predicated region
    $region34: #{tpu_custom_call.1} parent=1 // pred_check
      %p1495 = pneg %p60
    $region35: #{tpu_custom_call.1} parent=1 // pred_check_branch
      %1497 = sbr.rel (%p1495) target = $region37
    $region36: #{tpu_custom_call.1} parent=1 // pred_region
      %1498 = vst [vmem:[#allocation11] sm:$0xff] %v1492
    $region37: #{tpu_custom_call.1} parent=1 // pred_fallthru
      _
    // Predicated region
    $region38: #{tpu_custom_call.1} parent=1 // pred_check
      _
    $region39: #{tpu_custom_call.1} parent=1 // pred_check_branch
      %1500 = sbr.rel (0) target = $region41
    $region40: #{tpu_custom_call.1} parent=1 // pred_region
      %s1502 = ssub.s32 128, 128
      %1503 = vsyncadd [#allocation7], %s1502
      %s1505 = sshll.u32 [#allocation11], 4
      %s1506 = int_to_ptr.vmem [resolvable:$true] %s1505
      %1508 = dma.vmem_to_hbm [thread:$0]  %s1506, 128, %s4, [#allocation7]
    $region41: #{tpu_custom_call.1} parent=1 // pred_fallthru
      _
    // Predicated region
    $region42: #{tpu_custom_call.1} parent=1 // pred_check
      _
    $region43: #{tpu_custom_call.1} parent=1 // pred_check_branch
      %1510 = sbr.rel (0) target = $region45
    $region44: #{tpu_custom_call.1} parent=1 // pred_region
      %1511 = dma.done [#allocation7], 128
    $region45: #{tpu_custom_call.1} parent=1 // pred_fallthru
      _
    %1512 = vsyncpa [#allocation6], 1
    %1513 = vsyncpa [#allocation9], 1
    %1514 = vsyncpa [#allocation7], 1

</llo_original>
